<compile_context>
chip_gen: v7x
topology: tpu7x:2x2x1
jax: 0.10.0
libtpu: 0.0.40
codegen_flags: <defaults>
</compile_context>

<pallas_src>
import functools

import jax
import jax.numpy as jnp
from jax.experimental import pallas as pl
from jax.experimental.pallas import tpu as pltpu

OUT_PAD = 128  # lane-dense output width


# ----------------------------- fused Pallas kernel -----------------------------

def _make_fused_kernel(num_layers, N, has_residual, has_mid_layer, use_bf16):
    inv_n = 1.0 / float(N)
    cdt = jnp.bfloat16 if use_bf16 else jnp.float32

    def mm(a, b):  # matmul with optional bf16 operands, f32 accumulation
        return jnp.dot(a.astype(cdt), b.astype(cdt),
                       preferred_element_type=jnp.float32)

    def kernel(mT_ref, x_ref, xf_ref, *refs):
        out_ref = refs[-1]
        wrefs = refs[:-1]
        gcn_refs = wrefs[:2 * num_layers]
        rest = wrefs[2 * num_layers:]
        if has_residual:
            w1a_ref = rest[0]
            rest = rest[1:]
        (w1b_ref, b1_ref, w2_ref, b2_ref, w3_ref, b3_ref, w4_ref, b4_ref) = rest

        mT = mT_ref[...]                       # (gb, N, N), mT[b, i, j] = m[b, j, i]
        x = x_ref[...]                         # (gb, N, N) node features
        gb = x.shape[0]

        # ---- GCN normalization: D^{-1/2} (A^T + I) D^{-1/2}, all in VMEM ----
        at = jnp.where(mT != 0.0, 1.0, 0.0)    # at[b, i, j] = 1 iff edge j -> i
        ii = jax.lax.broadcasted_iota(jnp.int32, (gb, N, N), 1)
        jj = jax.lax.broadcasted_iota(jnp.int32, (gb, N, N), 2)
        at = jnp.where(ii == jj, 1.0, at)      # add self loops (weight 1)
        deg = jnp.sum(at, axis=2)              # (gb, N) in-degree of target i (>= 1)
        dinv = jax.lax.rsqrt(deg)
        na = dinv[:, :, None] * at * dinv[:, None, :]          # (gb, N, N)

        # ---- GCN stack: conv -> tanh; per-graph means stay in VMEM ----
        means = []
        cur = x
        for l in range(num_layers):
            w = gcn_refs[2 * l][...]                           # (Fin, H)
            b = gcn_refs[2 * l + 1][...]                       # (1, H)
            xw = jnp.einsum('bnf,fh->bnh', cur.astype(cdt), w.astype(cdt),
                            preferred_element_type=jnp.float32)
            y = jnp.einsum('bij,bjh->bih', na.astype(cdt), xw.astype(cdt),
                           preferred_element_type=jnp.float32)
            y = jnp.tanh(y + b)                                # f32 elementwise
            means.append(jnp.sum(y, axis=1) * inv_n)           # (gb, H) mean aggregation
            cur = y                                            # last y never hits HBM

        h = jnp.concatenate(means, axis=1) if has_mid_layer else means[-1]

        # ---- MLP head (BN folded, Dropout identity); triu-residual via scattered W1a ----
        z = mm(h, w1b_ref[...]) + b1_ref[...]
        if has_residual:
            xf = xf_ref[...][:, 0, :]                          # (gb, N*N) flattened features
            z = z + mm(xf, w1a_ref[...])
        z = jnp.maximum(z, 0.0)
        z = jnp.maximum(mm(z, w2_ref[...]) + b2_ref[...], 0.0)
        z = jnp.maximum(mm(z, w3_ref[...]) + b3_ref[...], 0.0)
        z = mm(z, w4_ref[...]) + b4_ref[...]                   # (gb, OUT_PAD) lane-dense
        out_ref[...] = jnp.reshape(z, (gb, 1, OUT_PAD))

    return kernel


def _pick_graph_block(B, max_gb=8):
    """Largest graphs-per-block <= max_gb that divides B while keeping >= 2 grid
    steps when B >= 2 (so the 'parallel' axis can feed both TCs on v7x)."""
    gb = 1
    for cand in range(1, min(B, max_gb) + 1):
        if B % cand == 0 and B // cand >= min(2, B):
            gb = cand
    return gb


def fused_forward(mT, x3, xflat, folded, cfg, num_layers, use_bf16=False):
    B, N, _ = x3.shape
    gb = _pick_graph_block(B)
    G = B // gb

    inputs = [mT, x3, xflat]
    in_specs = [
        pl.BlockSpec((gb, N, N), lambda g: (g, 0, 0)),
        pl.BlockSpec((gb, N, N), lambda g: (g, 0, 0)),
        pl.BlockSpec((gb, 1, N * N), lambda g: (g, 0, 0)),
    ]

    def add_full(arr):  # weights/biases: full 2-D blocks, resident across the grid
        inputs.append(arr)
        in_specs.append(pl.BlockSpec(arr.shape, lambda g: (0, 0)))

    for (w, b) in folded["gcn"]:
        add_full(w)
        add_full(b)
    if cfg["has_residual"]:
        add_full(folded["w1a"])
    for name in ("w1b", "b1", "w2", "b2", "w3", "b3", "w4", "b4"):
        add_full(folded[name])

    kernel = _make_fused_kernel(num_layers, N, cfg["has_residual"],
                                cfg["has_mid_layer"], use_bf16)

    out = pl.pallas_call(
        kernel,
        out_shape=jax.ShapeDtypeStruct((B, 1, OUT_PAD), jnp.float32),
        grid=(G,),
        in_specs=in_specs,
        out_specs=pl.BlockSpec((gb, 1, OUT_PAD), lambda g: (g, 0, 0)),
        compiler_params=pltpu.CompilerParams(dimension_semantics=("parallel",)),
    )(*inputs)
    return out[:, 0, :]                                        # (B, OUT_PAD)


# ----------------------------- parameters & folding -----------------------------

def _bn_params(dim):
    # (gamma, beta, running_mean, running_var, eps) -- PyTorch defaults, eval mode
    return (jnp.ones((dim,), jnp.float32), jnp.zeros((dim,), jnp.float32),
            jnp.zeros((dim,), jnp.float32), jnp.ones((dim,), jnp.float32), 1e-5)


def _bn_affine(bn):
    gamma, beta, mean, var, eps = bn
    s = gamma / jnp.sqrt(var + eps)
    t = beta - mean * s
    return s, t


def init_params(key, node_sz, hidden_channels, num_layers, hidden, output_dim,
                has_self_loop, has_mid_layer, has_residual):
    assert num_layers >= 1
    keys = jax.random.split(key, 32)
    ki = iter(range(32))

    def glorot(shape):
        bound = jnp.sqrt(6.0 / (shape[0] + shape[1]))
        return jax.random.uniform(keys[next(ki)], shape, jnp.float32, -bound, bound)

    def linear(fan_in, fan_out):
        bound = 1.0 / jnp.sqrt(fan_in)
        w = jax.random.uniform(keys[next(ki)], (fan_in, fan_out), jnp.float32, -bound, bound)
        b = jax.random.uniform(keys[next(ki)], (fan_out,), jnp.float32, -bound, bound)
        return w, b

    # GCNConv stack (glorot weights, zero bias, as in PyG)
    gcn = [(glorot((node_sz, hidden_channels)), jnp.zeros((hidden_channels,), jnp.float32))]
    for _ in range(num_layers - 1):
        gcn.append((glorot((hidden_channels, hidden_channels)),
                    jnp.zeros((hidden_channels,), jnp.float32)))

    # triu feature count matches the actual offset (fixes the has_self_loop dim mismatch;
    # equal to PyTorch's int(N*N/2 - N/2) for the valid offset=1 case)
    offset = 0 if has_self_loop else 1
    tri_dim = node_sz * (node_sz + 1) // 2 if offset == 0 else node_sz * (node_sz - 1) // 2
    bnh_dim = hidden_channels * num_layers if has_mid_layer else hidden_channels
    input_dim1 = tri_dim + bnh_dim if has_residual else bnh_dim

    mlp = [linear(input_dim1, hidden),
           linear(hidden, hidden // 2),
           linear(hidden // 2, hidden // 2),
           linear(hidden // 2, output_dim)]
    mlp_bn = [_bn_params(hidden), _bn_params(hidden // 2), _bn_params(hidden // 2)]

    return dict(gcn=gcn, bn=_bn_params(tri_dim), bnh=_bn_params(bnh_dim),
                mlp=mlp, mlp_bn=mlp_bn)


def fold_parameters(params, cfg, N):
    """Fold eval-mode BatchNorms into the Linears; scatter the triu rows of the first
    Linear over the flattened N*N feature positions; pad the last Linear to OUT_PAD lanes."""
    offset = 0 if cfg["has_self_loop"] else 1
    rows, cols = jnp.triu_indices(N, k=offset)
    flat_idx = rows * N + cols
    T = int(rows.shape[0])

    s_bn, t_bn = _bn_affine(params["bn"])
    s_bnh, t_bnh = _bn_affine(params["bnh"])
    s1, t1 = _bn_affine(params["mlp_bn"][0])
    W1, b1 = params["mlp"][0]
    hidden = W1.shape[1]

    folded = {"gcn": [(w, b.reshape(1, -1)) for (w, b) in params["gcn"]]}

    if cfg["has_residual"]:
        W1_top, W1_bot = W1[:T], W1[T:]
        w1a_tri = (s_bn[:, None] * W1_top) * s1[None, :]                 # (T, hidden)
        folded["w1a"] = jnp.zeros((N * N, hidden), jnp.float32).at[flat_idx].set(w1a_tri)
        folded["w1b"] = (s_bnh[:, None] * W1_bot) * s1[None, :]
        b1_eff = (t_bn @ W1_top + t_bnh @ W1_bot + b1) * s1 + t1
    else:
        folded["w1b"] = (s_bnh[:, None] * W1) * s1[None, :]
        b1_eff = (t_bnh @ W1 + b1) * s1 + t1
    folded["b1"] = b1_eff.reshape(1, -1)

    for i, name in ((1, "2"), (2, "3")):
        Wi, bi = params["mlp"][i]
        si, ti = _bn_affine(params["mlp_bn"][i])
        folded["w" + name] = Wi * si[None, :]
        folded["b" + name] = (bi * si + ti).reshape(1, -1)

    W4, b4 = params["mlp"][3]
    out_dim = W4.shape[1]
    folded["w4"] = jnp.zeros((W4.shape[0], OUT_PAD), jnp.float32).at[:, :out_dim].set(W4)
    folded["b4"] = jnp.zeros((OUT_PAD,), jnp.float32).at[:out_dim].set(b4).reshape(1, -1)
    return folded


# ----------------------------------- forward ------------------------------------

def neurograph_forward(params, m, node_feature, cfg, use_bf16=False):
    B, N, _ = m.shape
    num_layers = len(params["gcn"])
    out_dim = params["mlp"][3][0].shape[1]

    folded = fold_parameters(params, cfg, N)

    # tiny wrapper-side views only: pre-transposed adjacency (avoids an in-kernel
    # transpose) and a flattened feature view (feeds the scattered triu weights)
    mT = jnp.swapaxes(m, 1, 2).astype(jnp.float32)
    x3 = node_feature.astype(jnp.float32)
    xflat = node_feature.astype(jnp.float32).reshape(B, 1, N * N)

    out_padded = fused_forward(mT, x3, xflat, folded, cfg, num_layers, use_bf16=use_bf16)
    return out_padded[:, :out_dim]                                       # (B, output_dim)


# ------------------------------------- main --------------------------------------

if __name__ == "__main__":
    key = jax.random.PRNGKey(0)
    k_adj, k_feat, k_param = jax.random.split(key, 3)

    # small config consistent with the module
    B, N = 2, 16                        # num_graphs, node_sz (= num_features)
    hidden_channels, num_layers, hidden = 32, 2, 32
    cfg = dict(has_self_loop=False, has_mid_layer=True, has_residual=True,
               task="classification")
    output_dim = 2 if cfg["task"] == "classification" else 1

    # symmetric, sparse-ish adjacency and node features [B, N, node_sz]
    r = jax.random.uniform(k_adj, (B, N, N), jnp.float32)
    r = (r + jnp.swapaxes(r, 1, 2)) * 0.5
    m = jnp.where(r > 0.7, r, 0.0)
    node_feature = jax.random.normal(k_feat, (B, N, N), jnp.float32)

    params = init_params(k_param, N, hidden_channels, num_layers, hidden,
                         output_dim, cfg["has_self_loop"], cfg["has_mid_layer"],
                         cfg["has_residual"])

    # use_bf16=True is recommended on v6e/v7x at realistic N/B; kept off here to
    # preserve f32 numerics of the reference module.
    fwd = jax.jit(functools.partial(
        lambda p, mm_, nf, c: neurograph_forward(p, mm_, nf, c, use_bf16=False), c=cfg))
    out = jax.block_until_ready(fwd(params, m, node_feature))

    assert out.shape == (B, output_dim), out.shape
    assert bool(jnp.all(jnp.isfinite(out)))
    print("KERNEL_OK")
</pallas_src>

<mosaic_0001>
module attributes {stable_mosaic.version = 11 : i64} {
  func.func private @main(%arg0: i32) attributes {dimension_semantics = [#tpu.dimension_semantics<core_parallel>], iteration_bounds = array<i64: 2>, tpu.core_type = #tpu.core_type<sc_scalar_subcore>, window_params = []} {
    return
  }
}

module attributes {stable_mosaic.version = 11 : i64} {
  func.func private @main(%arg0: i32) attributes {dimension_semantics = [#tpu.dimension_semantics<core_parallel>], iteration_bounds = array<i64: 2>, tpu.core_type = #tpu.core_type<sc_scalar_subcore>, window_params = []} {
    return
  }
}

module attributes {stable_mosaic.version = 11 : i64} {
  func.func @kernel(%arg0: i32, %arg1: memref<1x16x16xf32, #tpu.memory_space<vmem>>, %arg2: memref<1x16x16xf32, #tpu.memory_space<vmem>>, %arg3: memref<1x1x256xf32, #tpu.memory_space<vmem>>, %arg4: memref<16x32xf32, #tpu.memory_space<vmem>>, %arg5: memref<1x32xf32, #tpu.memory_space<vmem>>, %arg6: memref<32x32xf32, #tpu.memory_space<vmem>>, %arg7: memref<1x32xf32, #tpu.memory_space<vmem>>, %arg8: memref<256x32xf32, #tpu.memory_space<vmem>>, %arg9: memref<64x32xf32, #tpu.memory_space<vmem>>, %arg10: memref<1x32xf32, #tpu.memory_space<vmem>>, %arg11: memref<32x16xf32, #tpu.memory_space<vmem>>, %arg12: memref<1x16xf32, #tpu.memory_space<vmem>>, %arg13: memref<16x16xf32, #tpu.memory_space<vmem>>, %arg14: memref<1x16xf32, #tpu.memory_space<vmem>>, %arg15: memref<16x128xf32, #tpu.memory_space<vmem>>, %arg16: memref<1x128xf32, #tpu.memory_space<vmem>>, %arg17: memref<1x1x128xf32, #tpu.memory_space<vmem>>) attributes {dimension_semantics = [#tpu.dimension_semantics<parallel>], iteration_bounds = array<i64: 2>, scalar_prefetch = 0 : i64, scratch_operands = 0 : i64, tpu.core_type = #tpu.core_type<tc>, window_params = [{transform_indices = @transform_0, window_bounds = array<i64: 1, 16, 16>}, {transform_indices = @transform_1, window_bounds = array<i64: 1, 16, 16>}, {transform_indices = @transform_2, window_bounds = array<i64: 1, 1, 256>}, {pipeline_mode = #tpu.pipeline_mode<synchronous>, transform_indices = @transform_3, window_bounds = array<i64: 16, 32>}, {pipeline_mode = #tpu.pipeline_mode<synchronous>, transform_indices = @transform_4, window_bounds = array<i64: 1, 32>}, {pipeline_mode = #tpu.pipeline_mode<synchronous>, transform_indices = @transform_5, window_bounds = array<i64: 32, 32>}, {pipeline_mode = #tpu.pipeline_mode<synchronous>, transform_indices = @transform_6, window_bounds = array<i64: 1, 32>}, {pipeline_mode = #tpu.pipeline_mode<synchronous>, transform_indices = @transform_7, window_bounds = array<i64: 256, 32>}, {pipeline_mode = #tpu.pipeline_mode<synchronous>, transform_indices = @transform_8, window_bounds = array<i64: 64, 32>}, {pipeline_mode = #tpu.pipeline_mode<synchronous>, transform_indices = @transform_9, window_bounds = array<i64: 1, 32>}, {pipeline_mode = #tpu.pipeline_mode<synchronous>, transform_indices = @transform_10, window_bounds = array<i64: 32, 16>}, {pipeline_mode = #tpu.pipeline_mode<synchronous>, transform_indices = @transform_11, window_bounds = array<i64: 1, 16>}, {pipeline_mode = #tpu.pipeline_mode<synchronous>, transform_indices = @transform_12, window_bounds = array<i64: 16, 16>}, {pipeline_mode = #tpu.pipeline_mode<synchronous>, transform_indices = @transform_13, window_bounds = array<i64: 1, 16>}, {pipeline_mode = #tpu.pipeline_mode<synchronous>, transform_indices = @transform_14, window_bounds = array<i64: 16, 128>}, {pipeline_mode = #tpu.pipeline_mode<synchronous>, transform_indices = @transform_15, window_bounds = array<i64: 1, 128>}, {transform_indices = @transform_16, window_bounds = array<i64: 1, 1, 128>}]} {
    %c0 = arith.constant 0 : index
    %c0_0 = arith.constant 0 : index
    %c0_1 = arith.constant 0 : index
    %0 = vector.load %arg1[%c0, %c0_0, %c0_1] : memref<1x16x16xf32, #tpu.memory_space<vmem>>, vector<1x16x16xf32>
    %c0_2 = arith.constant 0 : index
    %c0_3 = arith.constant 0 : index
    %c0_4 = arith.constant 0 : index
    %1 = vector.load %arg2[%c0_2, %c0_3, %c0_4] : memref<1x16x16xf32, #tpu.memory_space<vmem>>, vector<1x16x16xf32>
    %cst = arith.constant 0.000000e+00 : f32
    %2 = vector.broadcast %cst : f32 to vector<1x16x16xf32>
    %3 = arith.cmpf one, %0, %2 : vector<1x16x16xf32>
    %cst_5 = arith.constant 1.000000e+00 : f32
    %cst_6 = arith.constant 0.000000e+00 : f32
    %4 = vector.broadcast %cst_5 : f32 to vector<1x16x16xf32>
    %5 = vector.broadcast %cst_6 : f32 to vector<1x16x16xf32>
    %6 = arith.select %3, %4, %5 : vector<1x16x16xi1>, vector<1x16x16xf32>
    %7 = tpu.iota {dimensions = array<i32: 1>} : vector<1x16x16xi32>
    %8 = tpu.iota {dimensions = array<i32: 2>} : vector<1x16x16xi32>
    %9 = arith.cmpi eq, %7, %8 : vector<1x16x16xi32>
    %cst_7 = arith.constant 1.000000e+00 : f32
    %10 = vector.broadcast %cst_7 : f32 to vector<1x16x16xf32>
    %11 = arith.select %9, %10, %6 : vector<1x16x16xi1>, vector<1x16x16xf32>
    %cst_8 = arith.constant dense<0.000000e+00> : vector<1x16xf32>
    %12 = vector.multi_reduction <add>, %11, %cst_8 [2] : vector<1x16x16xf32> to vector<1x16xf32>
    %13 = math.rsqrt %12 : vector<1x16xf32>
    %14 = vector.shape_cast %13 : vector<1x16xf32> to vector<1x16x1xf32>
    %15 = vector.broadcast %14 : vector<1x16x1xf32> to vector<1x16x16xf32>
    %16 = arith.mulf %15, %11 : vector<1x16x16xf32>
    %17 = vector.shape_cast %13 : vector<1x16xf32> to vector<1x1x16xf32>
    %18 = vector.broadcast %17 : vector<1x1x16xf32> to vector<1x16x16xf32>
    %19 = arith.mulf %16, %18 : vector<1x16x16xf32>
    %c0_9 = arith.constant 0 : index
    %c0_10 = arith.constant 0 : index
    %20 = vector.load %arg4[%c0_9, %c0_10] : memref<16x32xf32, #tpu.memory_space<vmem>>, vector<16x32xf32>
    %c0_11 = arith.constant 0 : index
    %c0_12 = arith.constant 0 : index
    %21 = vector.load %arg5[%c0_11, %c0_12] : memref<1x32xf32, #tpu.memory_space<vmem>>, vector<1x32xf32>
    "tpu.trace_start"() <{level = 10 : i32, message = "bnf,fh->bnh"}> : () -> ()
    %cst_13 = arith.constant dense<0.000000e+00> : vector<1x16x32xf32>
    %22 = tpu.matmul %1, %20, %cst_13 {dimension_numbers = #tpu.dot_dimension_numbers<[2], [0], [0, 1], [1], [0, 0, 0, 1, 1, 1], [], []>} : vector<1x16x16xf32>, vector<16x32xf32>, vector<1x16x32xf32> -> vector<1x16x32xf32>
    "tpu.trace_stop"() : () -> ()
    "tpu.trace_start"() <{level = 10 : i32, message = "bij,bjh->bih"}> : () -> ()
    %cst_14 = arith.constant dense<0.000000e+00> : vector<1x16x32xf32>
    %23 = tpu.matmul %19, %22, %cst_14 {dimension_numbers = #tpu.dot_dimension_numbers<[2], [1], [1], [2], [0, 0, 0, 1, 1, 2], [0], [0]>} : vector<1x16x16xf32>, vector<1x16x32xf32>, vector<1x16x32xf32> -> vector<1x16x32xf32>
    "tpu.trace_stop"() : () -> ()
    %24 = vector.shape_cast %21 : vector<1x32xf32> to vector<1x1x32xf32>
    %25 = vector.broadcast %24 : vector<1x1x32xf32> to vector<1x16x32xf32>
    %26 = arith.addf %23, %25 : vector<1x16x32xf32>
    %27 = math.tanh %26 : vector<1x16x32xf32>
    %cst_15 = arith.constant dense<0.000000e+00> : vector<1x32xf32>
    %28 = vector.multi_reduction <add>, %27, %cst_15 [1] : vector<1x16x32xf32> to vector<1x32xf32>
    %cst_16 = arith.constant 6.250000e-02 : f32
    %29 = vector.broadcast %cst_16 : f32 to vector<1x32xf32>
    %30 = arith.mulf %28, %29 : vector<1x32xf32>
    %c0_17 = arith.constant 0 : index
    %c0_18 = arith.constant 0 : index
    %31 = vector.load %arg6[%c0_17, %c0_18] : memref<32x32xf32, #tpu.memory_space<vmem>>, vector<32x32xf32>
    %c0_19 = arith.constant 0 : index
    %c0_20 = arith.constant 0 : index
    %32 = vector.load %arg7[%c0_19, %c0_20] : memref<1x32xf32, #tpu.memory_space<vmem>>, vector<1x32xf32>
    "tpu.trace_start"() <{level = 10 : i32, message = "bnf,fh->bnh"}> : () -> ()
    %cst_21 = arith.constant dense<0.000000e+00> : vector<1x16x32xf32>
    %33 = tpu.matmul %27, %31, %cst_21 {dimension_numbers = #tpu.dot_dimension_numbers<[2], [0], [0, 1], [1], [0, 0, 0, 1, 1, 1], [], []>} : vector<1x16x32xf32>, vector<32x32xf32>, vector<1x16x32xf32> -> vector<1x16x32xf32>
    "tpu.trace_stop"() : () -> ()
    "tpu.trace_start"() <{level = 10 : i32, message = "bij,bjh->bih"}> : () -> ()
    %cst_22 = arith.constant dense<0.000000e+00> : vector<1x16x32xf32>
    %34 = tpu.matmul %19, %33, %cst_22 {dimension_numbers = #tpu.dot_dimension_numbers<[2], [1], [1], [2], [0, 0, 0, 1, 1, 2], [0], [0]>} : vector<1x16x16xf32>, vector<1x16x32xf32>, vector<1x16x32xf32> -> vector<1x16x32xf32>
    "tpu.trace_stop"() : () -> ()
    %35 = vector.shape_cast %32 : vector<1x32xf32> to vector<1x1x32xf32>
    %36 = vector.broadcast %35 : vector<1x1x32xf32> to vector<1x16x32xf32>
    %37 = arith.addf %34, %36 : vector<1x16x32xf32>
    %38 = math.tanh %37 : vector<1x16x32xf32>
    %cst_23 = arith.constant dense<0.000000e+00> : vector<1x32xf32>
    %39 = vector.multi_reduction <add>, %38, %cst_23 [1] : vector<1x16x32xf32> to vector<1x32xf32>
    %cst_24 = arith.constant 6.250000e-02 : f32
    %40 = vector.broadcast %cst_24 : f32 to vector<1x32xf32>
    %41 = arith.mulf %39, %40 : vector<1x32xf32>
    %42 = tpu.concatenate %30, %41 in 1 : vector<1x32xf32>, vector<1x32xf32> -> vector<1x64xf32>
    %c0_25 = arith.constant 0 : index
    %c0_26 = arith.constant 0 : index
    %43 = vector.load %arg9[%c0_25, %c0_26] : memref<64x32xf32, #tpu.memory_space<vmem>>, vector<64x32xf32>
    %cst_27 = arith.constant dense<0.000000e+00> : vector<1x32xf32>
    %44 = tpu.matmul %42, %43, %cst_27 {dimension_numbers = #tpu.dot_dimension_numbers<[1], [0], [0], [1], [0, 0, 1, 1], [], []>} : vector<1x64xf32>, vector<64x32xf32>, vector<1x32xf32> -> vector<1x32xf32>
    %c0_28 = arith.constant 0 : index
    %c0_29 = arith.constant 0 : index
    %45 = vector.load %arg10[%c0_28, %c0_29] : memref<1x32xf32, #tpu.memory_space<vmem>>, vector<1x32xf32>
    %46 = arith.addf %44, %45 : vector<1x32xf32>
    %c0_30 = arith.constant 0 : index
    %c0_31 = arith.constant 0 : index
    %c0_32 = arith.constant 0 : index
    %47 = vector.load %arg3[%c0_30, %c0_31, %c0_32] : memref<1x1x256xf32, #tpu.memory_space<vmem>>, vector<1x1x256xf32>
    %48 = vector.shape_cast %47 : vector<1x1x256xf32> to vector<1x256xf32>
    %c0_33 = arith.constant 0 : index
    %c0_34 = arith.constant 0 : index
    %49 = vector.load %arg8[%c0_33, %c0_34] : memref<256x32xf32, #tpu.memory_space<vmem>>, vector<256x32xf32>
    %cst_35 = arith.constant dense<0.000000e+00> : vector<1x32xf32>
    %50 = tpu.matmul %48, %49, %cst_35 {dimension_numbers = #tpu.dot_dimension_numbers<[1], [0], [0], [1], [0, 0, 1, 1], [], []>} : vector<1x256xf32>, vector<256x32xf32>, vector<1x32xf32> -> vector<1x32xf32>
    %51 = arith.addf %46, %50 : vector<1x32xf32>
    %cst_36 = arith.constant 0.000000e+00 : f32
    %52 = vector.broadcast %cst_36 : f32 to vector<1x32xf32>
    %53 = arith.maximumf %51, %52 : vector<1x32xf32>
    %c0_37 = arith.constant 0 : index
    %c0_38 = arith.constant 0 : index
    %54 = vector.load %arg11[%c0_37, %c0_38] : memref<32x16xf32, #tpu.memory_space<vmem>>, vector<32x16xf32>
    %cst_39 = arith.constant dense<0.000000e+00> : vector<1x16xf32>
    %55 = tpu.matmul %53, %54, %cst_39 {dimension_numbers = #tpu.dot_dimension_numbers<[1], [0], [0], [1], [0, 0, 1, 1], [], []>} : vector<1x32xf32>, vector<32x16xf32>, vector<1x16xf32> -> vector<1x16xf32>
    %c0_40 = arith.constant 0 : index
    %c0_41 = arith.constant 0 : index
    %56 = vector.load %arg12[%c0_40, %c0_41] : memref<1x16xf32, #tpu.memory_space<vmem>>, vector<1x16xf32>
    %57 = arith.addf %55, %56 : vector<1x16xf32>
    %cst_42 = arith.constant 0.000000e+00 : f32
    %58 = vector.broadcast %cst_42 : f32 to vector<1x16xf32>
    %59 = arith.maximumf %57, %58 : vector<1x16xf32>
    %c0_43 = arith.constant 0 : index
    %c0_44 = arith.constant 0 : index
    %60 = vector.load %arg13[%c0_43, %c0_44] : memref<16x16xf32, #tpu.memory_space<vmem>>, vector<16x16xf32>
    %cst_45 = arith.constant dense<0.000000e+00> : vector<1x16xf32>
    %61 = tpu.matmul %59, %60, %cst_45 {dimension_numbers = #tpu.dot_dimension_numbers<[1], [0], [0], [1], [0, 0, 1, 1], [], []>} : vector<1x16xf32>, vector<16x16xf32>, vector<1x16xf32> -> vector<1x16xf32>
    %c0_46 = arith.constant 0 : index
    %c0_47 = arith.constant 0 : index
    %62 = vector.load %arg14[%c0_46, %c0_47] : memref<1x16xf32, #tpu.memory_space<vmem>>, vector<1x16xf32>
    %63 = arith.addf %61, %62 : vector<1x16xf32>
    %cst_48 = arith.constant 0.000000e+00 : f32
    %64 = vector.broadcast %cst_48 : f32 to vector<1x16xf32>
    %65 = arith.maximumf %63, %64 : vector<1x16xf32>
    %c0_49 = arith.constant 0 : index
    %c0_50 = arith.constant 0 : index
    %66 = vector.load %arg15[%c0_49, %c0_50] : memref<16x128xf32, #tpu.memory_space<vmem>>, vector<16x128xf32>
    %cst_51 = arith.constant dense<0.000000e+00> : vector<1x128xf32>
    %67 = tpu.matmul %65, %66, %cst_51 {dimension_numbers = #tpu.dot_dimension_numbers<[1], [0], [0], [1], [0, 0, 1, 1], [], []>} : vector<1x16xf32>, vector<16x128xf32>, vector<1x128xf32> -> vector<1x128xf32>
    %c0_52 = arith.constant 0 : index
    %c0_53 = arith.constant 0 : index
    %68 = vector.load %arg16[%c0_52, %c0_53] : memref<1x128xf32, #tpu.memory_space<vmem>>, vector<1x128xf32>
    %69 = arith.addf %67, %68 : vector<1x128xf32>
    %70 = vector.shape_cast %69 : vector<1x128xf32> to vector<1x1x128xf32>
    %c0_54 = arith.constant 0 : index
    %c0_55 = arith.constant 0 : index
    %c0_56 = arith.constant 0 : index
    %71 = vector.load %arg17[%c0_54, %c0_55, %c0_56] : memref<1x1x128xf32, #tpu.memory_space<vmem>>, vector<1x1x128xf32>
    tpu.vector_store %arg17[%c0_54, %c0_55, %c0_56], %70 {strides = array<i32>} : memref<1x1x128xf32, #tpu.memory_space<vmem>>, vector<1x1x128xf32>,
    return
  }
  func.func @transform_0(%arg0: i32) -> (i32, i32, i32) {
    %c0_i32 = arith.constant 0 : i32
    %c0_i32_0 = arith.constant 0 : i32
    %c0_i32_1 = arith.constant 0 : i32
    return %arg0, %c0_i32, %c0_i32_0 : i32, i32, i32
  }
  func.func @transform_1(%arg0: i32) -> (i32, i32, i32) {
    %c0_i32 = arith.constant 0 : i32
    %c0_i32_0 = arith.constant 0 : i32
    %c0_i32_1 = arith.constant 0 : i32
    return %arg0, %c0_i32, %c0_i32_0 : i32, i32, i32
  }
  func.func @transform_2(%arg0: i32) -> (i32, i32, i32) {
    %c0_i32 = arith.constant 0 : i32
    %c0_i32_0 = arith.constant 0 : i32
    %c0_i32_1 = arith.constant 0 : i32
    return %arg0, %c0_i32, %c0_i32_0 : i32, i32, i32
  }
  func.func @transform_3(%arg0: i32) -> (i32, i32) {
    %c0_i32 = arith.constant 0 : i32
    %c0_i32_0 = arith.constant 0 : i32
    %c0_i32_1 = arith.constant 0 : i32
    return %c0_i32, %c0_i32_0 : i32, i32
  }
  func.func @transform_4(%arg0: i32) -> (i32, i32) {
    %c0_i32 = arith.constant 0 : i32
    %c0_i32_0 = arith.constant 0 : i32
    %c0_i32_1 = arith.constant 0 : i32
    return %c0_i32, %c0_i32_0 : i32, i32
  }
  func.func @transform_5(%arg0: i32) -> (i32, i32) {
    %c0_i32 = arith.constant 0 : i32
    %c0_i32_0 = arith.constant 0 : i32
    %c0_i32_1 = arith.constant 0 : i32
    return %c0_i32, %c0_i32_0 : i32, i32
  }
  func.func @transform_6(%arg0: i32) -> (i32, i32) {
    %c0_i32 = arith.constant 0 : i32
    %c0_i32_0 = arith.constant 0 : i32
    %c0_i32_1 = arith.constant 0 : i32
    return %c0_i32, %c0_i32_0 : i32, i32
  }
  func.func @transform_7(%arg0: i32) -> (i32, i32) {
    %c0_i32 = arith.constant 0 : i32
    %c0_i32_0 = arith.constant 0 : i32
    %c0_i32_1 = arith.constant 0 : i32
    return %c0_i32, %c0_i32_0 : i32, i32
  }
  func.func @transform_8(%arg0: i32) -> (i32, i32) {
    %c0_i32 = arith.constant 0 : i32
    %c0_i32_0 = arith.constant 0 : i32
    %c0_i32_1 = arith.constant 0 : i32
    return %c0_i32, %c0_i32_0 : i32, i32
  }
  func.func @transform_9(%arg0: i32) -> (i32, i32) {
    %c0_i32 = arith.constant 0 : i32
    %c0_i32_0 = arith.constant 0 : i32
    %c0_i32_1 = arith.constant 0 : i32
    return %c0_i32, %c0_i32_0 : i32, i32
  }
  func.func @transform_10(%arg0: i32) -> (i32, i32) {
    %c0_i32 = arith.constant 0 : i32
    %c0_i32_0 = arith.constant 0 : i32
    %c0_i32_1 = arith.constant 0 : i32
    return %c0_i32, %c0_i32_0 : i32, i32
  }
  func.func @transform_11(%arg0: i32) -> (i32, i32) {
    %c0_i32 = arith.constant 0 : i32
    %c0_i32_0 = arith.constant 0 : i32
    %c0_i32_1 = arith.constant 0 : i32
    return %c0_i32, %c0_i32_0 : i32, i32
  }
  func.func @transform_12(%arg0: i32) -> (i32, i32) {
    %c0_i32 = arith.constant 0 : i32
    %c0_i32_0 = arith.constant 0 : i32
    %c0_i32_1 = arith.constant 0 : i32
    return %c0_i32, %c0_i32_0 : i32, i32
  }
  func.func @transform_13(%arg0: i32) -> (i32, i32) {
    %c0_i32 = arith.constant 0 : i32
    %c0_i32_0 = arith.constant 0 : i32
    %c0_i32_1 = arith.constant 0 : i32
    return %c0_i32, %c0_i32_0 : i32, i32
  }
  func.func @transform_14(%arg0: i32) -> (i32, i32) {
    %c0_i32 = arith.constant 0 : i32
    %c0_i32_0 = arith.constant 0 : i32
    %c0_i32_1 = arith.constant 0 : i32
    return %c0_i32, %c0_i32_0 : i32, i32
  }
  func.func @transform_15(%arg0: i32) -> (i32, i32) {
    %c0_i32 = arith.constant 0 : i32
    %c0_i32_0 = arith.constant 0 : i32
    %c0_i32_1 = arith.constant 0 : i32
    return %c0_i32, %c0_i32_0 : i32, i32
  }
  func.func @transform_16(%arg0: i32) -> (i32, i32, i32) {
    %c0_i32 = arith.constant 0 : i32
    %c0_i32_0 = arith.constant 0 : i32
    %c0_i32_1 = arith.constant 0 : i32
    return %arg0, %c0_i32, %c0_i32_0 : i32, i32, i32
  }
}

</mosaic_0001>

<llo_original>
// kernel: _lambda_.1
$region0: #{_lambda_.1}
  #allocation0 [shape = 'u32[]', space=smem, size = 0x4, offset = 0x4, fixed_abs, tag = 'smem constant byte address 0x4 - core index']
  #allocation1 [shape = 'u32[144,128]{1,0:T(1,128)}', space=vmem, size = 0x12000, scoped, tag = 'internal scratch']
  %s0 = inlined_call_operand.vmem [shape: f32[2,16,16], index: 0, kind: input, shape index: {}]
  %s1 = inlined_call_operand.vmem [shape: f32[2,16,16], index: 1, kind: input, shape index: {}]
  %s2 = inlined_call_operand.vmem [shape: f32[2,1,256], index: 2, kind: input, shape index: {}]
  %s3 = inlined_call_operand.vmem [shape: f32[16,32], index: 3, kind: input, shape index: {}]
  %s4 = inlined_call_operand.vmem [shape: f32[1,32], index: 4, kind: input, shape index: {}]
  %s5 = inlined_call_operand.vmem [shape: f32[32,32], index: 5, kind: input, shape index: {}]
  %s6 = inlined_call_operand.vmem [shape: f32[1,32], index: 6, kind: input, shape index: {}]
  %s7 = inlined_call_operand.vmem [shape: f32[256,32], index: 7, kind: input, shape index: {}]
  %s8 = inlined_call_operand.vmem [shape: f32[64,32], index: 8, kind: input, shape index: {}]
  %s9 = inlined_call_operand.vmem [shape: f32[1,32], index: 9, kind: input, shape index: {}]
  %s10 = inlined_call_operand.vmem [shape: f32[32,16], index: 10, kind: input, shape index: {}]
  %s11 = inlined_call_operand.vmem [shape: f32[1,16], index: 11, kind: input, shape index: {}]
  %s12 = inlined_call_operand.vmem [shape: f32[16,16], index: 12, kind: input, shape index: {}]
  %s13 = inlined_call_operand.vmem [shape: f32[1,16], index: 13, kind: input, shape index: {}]
  %s14 = inlined_call_operand.vmem [shape: f32[16,128], index: 14, kind: input, shape index: {}]
  %s15 = inlined_call_operand.vmem [shape: f32[1,128], index: 15, kind: input, shape index: {}]
  %s16 = inlined_call_operand.hbm [shape: f32[2,1,128], index: 16, kind: output, shape index: {}]
  %s17 = sld [smem:[#allocation0]]
  $region97: #{_lambda_.1} parent=0
    _
  %s19 = ssub.s32 1, %s17
  %s20 = scalar_select 0, %s19, %s17
  $region1: #{_lambda_.1} parent=0
    #allocation2 [shape = 'u8[1024]{0}', space=vmem, size = 0x400, scoped, tag = 'output window, operand 0']
    #allocation3 [shape = 's32[2]{0}', space=sflag, size = 0x8, scoped, tag = 'scoped memory for _lambda_.1']
    %21 = vsyncpa [#allocation3], 0
    %s22 = scalar_lea.sflag [#allocation3], 1
    %23 = vsyncpa %s22, 0
    loop: start=0, step=1, limit=4
    $region2: #{_lambda_.1} parent=1 // loop_pre_header
      _
    $region3: #{_lambda_.1} parent=1 // loop_header
      %s25 = sphi 0, %s29
      %p26 = scmp.ge.s32.totalorder %s25, 4
      %s35 = sphi 0, %s37
      %s38 = sphi 0, %s35
      %s39 = sphi 0, %s38
      %s55 = sphi 0, %s39
      %s61 = sphi 0, %s63
      %s64 = sphi 0, %s61
      %s65 = sphi 0, %s64
      %s81 = sphi 0, %s65
      %s87 = sphi 0, %s89
      %s90 = sphi 0, %s87
      %s91 = sphi 0, %s90
      %s107 = sphi 0, %s91
      %s111 = sphi 0, %s111
      %s113 = sphi 0, %s111
      %s114 = sphi 0, %s113
      %s128 = sphi 0, %s114
      %s132 = sphi 0, %s132
      %s134 = sphi 0, %s132
      %s135 = sphi 0, %s134
      %s149 = sphi 0, %s135
      %s153 = sphi 0, %s153
      %s155 = sphi 0, %s153
      %s156 = sphi 0, %s155
      %s170 = sphi 0, %s156
      %s174 = sphi 0, %s174
      %s176 = sphi 0, %s174
      %s177 = sphi 0, %s176
      %s191 = sphi 0, %s177
      %s195 = sphi 0, %s195
      %s197 = sphi 0, %s195
      %s198 = sphi 0, %s197
      %s212 = sphi 0, %s198
      %s216 = sphi 0, %s216
      %s218 = sphi 0, %s216
      %s219 = sphi 0, %s218
      %s233 = sphi 0, %s219
      %s237 = sphi 0, %s237
      %s239 = sphi 0, %s237
      %s240 = sphi 0, %s239
      %s254 = sphi 0, %s240
      %s258 = sphi 0, %s258
      %s260 = sphi 0, %s258
      %s261 = sphi 0, %s260
      %s275 = sphi 0, %s261
      %s279 = sphi 0, %s279
      %s281 = sphi 0, %s279
      %s282 = sphi 0, %s281
      %s296 = sphi 0, %s282
      %s300 = sphi 0, %s300
      %s302 = sphi 0, %s300
      %s303 = sphi 0, %s302
      %s317 = sphi 0, %s303
      %s321 = sphi 0, %s321
      %s323 = sphi 0, %s321
      %s324 = sphi 0, %s323
      %s338 = sphi 0, %s324
      %s342 = sphi 0, %s342
      %s344 = sphi 0, %s342
      %s345 = sphi 0, %s344
      %s359 = sphi 0, %s345
      %s363 = sphi 0, %s363
      %s365 = sphi 0, %s363
      %s366 = sphi 0, %s365
      %s380 = sphi 0, %s366
      %s386 = sphi 0, %s388
      %s389 = sphi 0, %s386
      %s390 = sphi 0, %s389
      %s406 = sphi 0, %s390
    $region4: #{_lambda_.1} parent=1 // loop_header_branch
      %28 = sbr.rel (%p26) target = $region8
    $region5: #{_lambda_.1} parent=1 // loop_body
      %s30 = ssub.s32 %s25, 1
      %s31 = ssub.s32 %s25, 2
      %s32 = sadd.s32 %s25, 1
      %s33 = ssub.s32 %s25, %s32
      %p34 = scmp.eq.s32.totalorder %s33, 0
      %s36 = sadd.s32 %s35, 1
      %s37 = scalar_select %p34, %s35, %s36
      %p40 = pneg %p34
      %p41 = scmp.eq.s32.totalorder %s25, 1
      %p42 = por %p40, %p41
      %p43 = scmp.ne.s32.totalorder %s35, %s38
      %p44 = scmp.eq.s32.totalorder %s25, 0
      %p45 = por %p43, %p44
      %p46 = scmp.ne.s32.totalorder %s35, %s38
      %p47 = scmp.eq.s32.totalorder %s30, 1
      %p48 = por %p46, %p47
      %p49 = scmp.ne.s32.totalorder %s38, %s39
      %p50 = scmp.eq.s32.totalorder %s30, 0
      %p51 = por %p49, %p50
      %p52 = scmp.ne.s32.totalorder %s38, %s39
      %p53 = scmp.eq.s32.totalorder %s31, 1
      %p54 = por %p52, %p53
      %p56 = scmp.ne.s32.totalorder %s39, %s55
      %p57 = scmp.eq.s32.totalorder %s31, 0
      %p58 = por %p56, %p57
      %s59 = ssub.s32 %s25, %s32
      %p60 = scmp.eq.s32.totalorder %s59, 0
      %s62 = sadd.s32 %s61, 1
      %s63 = scalar_select %p60, %s61, %s62
      %p66 = pneg %p60
      %p67 = scmp.eq.s32.totalorder %s25, 1
      %p68 = por %p66, %p67
      %p69 = scmp.ne.s32.totalorder %s61, %s64
      %p70 = scmp.eq.s32.totalorder %s25, 0
      %p71 = por %p69, %p70
      %p72 = scmp.ne.s32.totalorder %s61, %s64
      %p73 = scmp.eq.s32.totalorder %s30, 1
      %p74 = por %p72, %p73
      %p75 = scmp.ne.s32.totalorder %s64, %s65
      %p76 = scmp.eq.s32.totalorder %s30, 0
      %p77 = por %p75, %p76
      %p78 = scmp.ne.s32.totalorder %s64, %s65
      %p79 = scmp.eq.s32.totalorder %s31, 1
      %p80 = por %p78, %p79
      %p82 = scmp.ne.s32.totalorder %s65, %s81
      %p83 = scmp.eq.s32.totalorder %s31, 0
      %p84 = por %p82, %p83
      %s85 = ssub.s32 %s25, %s32
      %p86 = scmp.eq.s32.totalorder %s85, 0
      %s88 = sadd.s32 %s87, 1
      %s89 = scalar_select %p86, %s87, %s88
      %p92 = pneg %p86
      %p93 = scmp.eq.s32.totalorder %s25, 1
      %p94 = por %p92, %p93
      %p95 = scmp.ne.s32.totalorder %s87, %s90
      %p96 = scmp.eq.s32.totalorder %s25, 0
      %p97 = por %p95, %p96
      %p98 = scmp.ne.s32.totalorder %s87, %s90
      %p99 = scmp.eq.s32.totalorder %s30, 1
      %p100 = por %p98, %p99
      %p101 = scmp.ne.s32.totalorder %s90, %s91
      %p102 = scmp.eq.s32.totalorder %s30, 0
      %p103 = por %p101, %p102
      %p104 = scmp.ne.s32.totalorder %s90, %s91
      %p105 = scmp.eq.s32.totalorder %s31, 1
      %p106 = por %p104, %p105
      %p108 = scmp.ne.s32.totalorder %s91, %s107
      %p109 = scmp.eq.s32.totalorder %s31, 0
      %p110 = por %p108, %p109
      %s112 = sadd.s32 %s111, 1
      %p115 = scmp.eq.s32.totalorder %s25, 1
      %p116 = scmp.ne.s32.totalorder %s111, %s113
      %p117 = scmp.eq.s32.totalorder %s25, 0
      %p118 = por %p116, %p117
      %p119 = scmp.ne.s32.totalorder %s111, %s113
      %p120 = scmp.eq.s32.totalorder %s30, 1
      %p121 = por %p119, %p120
      %p122 = scmp.ne.s32.totalorder %s113, %s114
      %p123 = scmp.eq.s32.totalorder %s30, 0
      %p124 = por %p122, %p123
      %p125 = scmp.ne.s32.totalorder %s113, %s114
      %p126 = scmp.eq.s32.totalorder %s31, 1
      %p127 = por %p125, %p126
      %p129 = scmp.ne.s32.totalorder %s114, %s128
      %p130 = scmp.eq.s32.totalorder %s31, 0
      %p131 = por %p129, %p130
      %s133 = sadd.s32 %s132, 1
      %p136 = scmp.eq.s32.totalorder %s25, 1
      %p137 = scmp.ne.s32.totalorder %s132, %s134
      %p138 = scmp.eq.s32.totalorder %s25, 0
      %p139 = por %p137, %p138
      %p140 = scmp.ne.s32.totalorder %s132, %s134
      %p141 = scmp.eq.s32.totalorder %s30, 1
      %p142 = por %p140, %p141
      %p143 = scmp.ne.s32.totalorder %s134, %s135
      %p144 = scmp.eq.s32.totalorder %s30, 0
      %p145 = por %p143, %p144
      %p146 = scmp.ne.s32.totalorder %s134, %s135
      %p147 = scmp.eq.s32.totalorder %s31, 1
      %p148 = por %p146, %p147
      %p150 = scmp.ne.s32.totalorder %s135, %s149
      %p151 = scmp.eq.s32.totalorder %s31, 0
      %p152 = por %p150, %p151
      %s154 = sadd.s32 %s153, 1
      %p157 = scmp.eq.s32.totalorder %s25, 1
      %p158 = scmp.ne.s32.totalorder %s153, %s155
      %p159 = scmp.eq.s32.totalorder %s25, 0
      %p160 = por %p158, %p159
      %p161 = scmp.ne.s32.totalorder %s153, %s155
      %p162 = scmp.eq.s32.totalorder %s30, 1
      %p163 = por %p161, %p162
      %p164 = scmp.ne.s32.totalorder %s155, %s156
      %p165 = scmp.eq.s32.totalorder %s30, 0
      %p166 = por %p164, %p165
      %p167 = scmp.ne.s32.totalorder %s155, %s156
      %p168 = scmp.eq.s32.totalorder %s31, 1
      %p169 = por %p167, %p168
      %p171 = scmp.ne.s32.totalorder %s156, %s170
      %p172 = scmp.eq.s32.totalorder %s31, 0
      %p173 = por %p171, %p172
      %s175 = sadd.s32 %s174, 1
      %p178 = scmp.eq.s32.totalorder %s25, 1
      %p179 = scmp.ne.s32.totalorder %s174, %s176
      %p180 = scmp.eq.s32.totalorder %s25, 0
      %p181 = por %p179, %p180
      %p182 = scmp.ne.s32.totalorder %s174, %s176
      %p183 = scmp.eq.s32.totalorder %s30, 1
      %p184 = por %p182, %p183
      %p185 = scmp.ne.s32.totalorder %s176, %s177
      %p186 = scmp.eq.s32.totalorder %s30, 0
      %p187 = por %p185, %p186
      %p188 = scmp.ne.s32.totalorder %s176, %s177
      %p189 = scmp.eq.s32.totalorder %s31, 1
      %p190 = por %p188, %p189
      %p192 = scmp.ne.s32.totalorder %s177, %s191
      %p193 = scmp.eq.s32.totalorder %s31, 0
      %p194 = por %p192, %p193
      %s196 = sadd.s32 %s195, 1
      %p199 = scmp.eq.s32.totalorder %s25, 1
      %p200 = scmp.ne.s32.totalorder %s195, %s197
      %p201 = scmp.eq.s32.totalorder %s25, 0
      %p202 = por %p200, %p201
      %p203 = scmp.ne.s32.totalorder %s195, %s197
      %p204 = scmp.eq.s32.totalorder %s30, 1
      %p205 = por %p203, %p204
      %p206 = scmp.ne.s32.totalorder %s197, %s198
      %p207 = scmp.eq.s32.totalorder %s30, 0
      %p208 = por %p206, %p207
      %p209 = scmp.ne.s32.totalorder %s197, %s198
      %p210 = scmp.eq.s32.totalorder %s31, 1
      %p211 = por %p209, %p210
      %p213 = scmp.ne.s32.totalorder %s198, %s212
      %p214 = scmp.eq.s32.totalorder %s31, 0
      %p215 = por %p213, %p214
      %s217 = sadd.s32 %s216, 1
      %p220 = scmp.eq.s32.totalorder %s25, 1
      %p221 = scmp.ne.s32.totalorder %s216, %s218
      %p222 = scmp.eq.s32.totalorder %s25, 0
      %p223 = por %p221, %p222
      %p224 = scmp.ne.s32.totalorder %s216, %s218
      %p225 = scmp.eq.s32.totalorder %s30, 1
      %p226 = por %p224, %p225
      %p227 = scmp.ne.s32.totalorder %s218, %s219
      %p228 = scmp.eq.s32.totalorder %s30, 0
      %p229 = por %p227, %p228
      %p230 = scmp.ne.s32.totalorder %s218, %s219
      %p231 = scmp.eq.s32.totalorder %s31, 1
      %p232 = por %p230, %p231
      %p234 = scmp.ne.s32.totalorder %s219, %s233
      %p235 = scmp.eq.s32.totalorder %s31, 0
      %p236 = por %p234, %p235
      %s238 = sadd.s32 %s237, 1
      %p241 = scmp.eq.s32.totalorder %s25, 1
      %p242 = scmp.ne.s32.totalorder %s237, %s239
      %p243 = scmp.eq.s32.totalorder %s25, 0
      %p244 = por %p242, %p243
      %p245 = scmp.ne.s32.totalorder %s237, %s239
      %p246 = scmp.eq.s32.totalorder %s30, 1
      %p247 = por %p245, %p246
      %p248 = scmp.ne.s32.totalorder %s239, %s240
      %p249 = scmp.eq.s32.totalorder %s30, 0
      %p250 = por %p248, %p249
      %p251 = scmp.ne.s32.totalorder %s239, %s240
      %p252 = scmp.eq.s32.totalorder %s31, 1
      %p253 = por %p251, %p252
      %p255 = scmp.ne.s32.totalorder %s240, %s254
      %p256 = scmp.eq.s32.totalorder %s31, 0
      %p257 = por %p255, %p256
      %s259 = sadd.s32 %s258, 1
      %p262 = scmp.eq.s32.totalorder %s25, 1
      %p263 = scmp.ne.s32.totalorder %s258, %s260
      %p264 = scmp.eq.s32.totalorder %s25, 0
      %p265 = por %p263, %p264
      %p266 = scmp.ne.s32.totalorder %s258, %s260
      %p267 = scmp.eq.s32.totalorder %s30, 1
      %p268 = por %p266, %p267
      %p269 = scmp.ne.s32.totalorder %s260, %s261
      %p270 = scmp.eq.s32.totalorder %s30, 0
      %p271 = por %p269, %p270
      %p272 = scmp.ne.s32.totalorder %s260, %s261
      %p273 = scmp.eq.s32.totalorder %s31, 1
      %p274 = por %p272, %p273
      %p276 = scmp.ne.s32.totalorder %s261, %s275
      %p277 = scmp.eq.s32.totalorder %s31, 0
      %p278 = por %p276, %p277
      %s280 = sadd.s32 %s279, 1
      %p283 = scmp.eq.s32.totalorder %s25, 1
      %p284 = scmp.ne.s32.totalorder %s279, %s281
      %p285 = scmp.eq.s32.totalorder %s25, 0
      %p286 = por %p284, %p285
      %p287 = scmp.ne.s32.totalorder %s279, %s281
      %p288 = scmp.eq.s32.totalorder %s30, 1
      %p289 = por %p287, %p288
      %p290 = scmp.ne.s32.totalorder %s281, %s282
      %p291 = scmp.eq.s32.totalorder %s30, 0
      %p292 = por %p290, %p291
      %p293 = scmp.ne.s32.totalorder %s281, %s282
      %p294 = scmp.eq.s32.totalorder %s31, 1
      %p295 = por %p293, %p294
      %p297 = scmp.ne.s32.totalorder %s282, %s296
      %p298 = scmp.eq.s32.totalorder %s31, 0
      %p299 = por %p297, %p298
      %s301 = sadd.s32 %s300, 1
      %p304 = scmp.eq.s32.totalorder %s25, 1
      %p305 = scmp.ne.s32.totalorder %s300, %s302
      %p306 = scmp.eq.s32.totalorder %s25, 0
      %p307 = por %p305, %p306
      %p308 = scmp.ne.s32.totalorder %s300, %s302
      %p309 = scmp.eq.s32.totalorder %s30, 1
      %p310 = por %p308, %p309
      %p311 = scmp.ne.s32.totalorder %s302, %s303
      %p312 = scmp.eq.s32.totalorder %s30, 0
      %p313 = por %p311, %p312
      %p314 = scmp.ne.s32.totalorder %s302, %s303
      %p315 = scmp.eq.s32.totalorder %s31, 1
      %p316 = por %p314, %p315
      %p318 = scmp.ne.s32.totalorder %s303, %s317
      %p319 = scmp.eq.s32.totalorder %s31, 0
      %p320 = por %p318, %p319
      %s322 = sadd.s32 %s321, 1
      %p325 = scmp.eq.s32.totalorder %s25, 1
      %p326 = scmp.ne.s32.totalorder %s321, %s323
      %p327 = scmp.eq.s32.totalorder %s25, 0
      %p328 = por %p326, %p327
      %p329 = scmp.ne.s32.totalorder %s321, %s323
      %p330 = scmp.eq.s32.totalorder %s30, 1
      %p331 = por %p329, %p330
      %p332 = scmp.ne.s32.totalorder %s323, %s324
      %p333 = scmp.eq.s32.totalorder %s30, 0
      %p334 = por %p332, %p333
      %p335 = scmp.ne.s32.totalorder %s323, %s324
      %p336 = scmp.eq.s32.totalorder %s31, 1
      %p337 = por %p335, %p336
      %p339 = scmp.ne.s32.totalorder %s324, %s338
      %p340 = scmp.eq.s32.totalorder %s31, 0
      %p341 = por %p339, %p340
      %s343 = sadd.s32 %s342, 1
      %p346 = scmp.eq.s32.totalorder %s25, 1
      %p347 = scmp.ne.s32.totalorder %s342, %s344
      %p348 = scmp.eq.s32.totalorder %s25, 0
      %p349 = por %p347, %p348
      %p350 = scmp.ne.s32.totalorder %s342, %s344
      %p351 = scmp.eq.s32.totalorder %s30, 1
      %p352 = por %p350, %p351
      %p353 = scmp.ne.s32.totalorder %s344, %s345
      %p354 = scmp.eq.s32.totalorder %s30, 0
      %p355 = por %p353, %p354
      %p356 = scmp.ne.s32.totalorder %s344, %s345
      %p357 = scmp.eq.s32.totalorder %s31, 1
      %p358 = por %p356, %p357
      %p360 = scmp.ne.s32.totalorder %s345, %s359
      %p361 = scmp.eq.s32.totalorder %s31, 0
      %p362 = por %p360, %p361
      %s364 = sadd.s32 %s363, 1
      %p367 = scmp.eq.s32.totalorder %s25, 1
      %p368 = scmp.ne.s32.totalorder %s363, %s365
      %p369 = scmp.eq.s32.totalorder %s25, 0
      %p370 = por %p368, %p369
      %p371 = scmp.ne.s32.totalorder %s363, %s365
      %p372 = scmp.eq.s32.totalorder %s30, 1
      %p373 = por %p371, %p372
      %p374 = scmp.ne.s32.totalorder %s365, %s366
      %p375 = scmp.eq.s32.totalorder %s30, 0
      %p376 = por %p374, %p375
      %p377 = scmp.ne.s32.totalorder %s365, %s366
      %p378 = scmp.eq.s32.totalorder %s31, 1
      %p379 = por %p377, %p378
      %p381 = scmp.ne.s32.totalorder %s366, %s380
      %p382 = scmp.eq.s32.totalorder %s31, 0
      %p383 = por %p381, %p382
      %s384 = ssub.s32 %s25, %s32
      %p385 = scmp.eq.s32.totalorder %s384, 0
      %s387 = sadd.s32 %s386, 1
      %s388 = scalar_select %p385, %s386, %s387
      %p391 = pneg %p385
      %p392 = scmp.eq.s32.totalorder %s25, 1
      %p393 = por %p391, %p392
      %p394 = scmp.ne.s32.totalorder %s386, %s389
      %p395 = scmp.eq.s32.totalorder %s25, 0
      %p396 = por %p394, %p395
      %p397 = scmp.ne.s32.totalorder %s386, %s389
      %p398 = scmp.eq.s32.totalorder %s30, 1
      %p399 = por %p397, %p398
      %p400 = scmp.ne.s32.totalorder %s389, %s390
      %p401 = scmp.eq.s32.totalorder %s30, 0
      %p402 = por %p400, %p401
      %p403 = scmp.ne.s32.totalorder %s389, %s390
      %p404 = scmp.eq.s32.totalorder %s31, 1
      %p405 = por %p403, %p404
      %p407 = scmp.ne.s32.totalorder %s390, %s406
      %p408 = scmp.eq.s32.totalorder %s31, 0
      %p409 = por %p407, %p408
      %p410 = scmp.le.s32.totalorder 1, %s25
      %p411 = scmp.lt.s32.totalorder %s25, 3
      %p412 = pnand %p410, %p411
      %p413 = pneg %p412
      // Predicated region
      $region9: #{_lambda_.1} parent=5 // pred_check
        _
      $region10: #{_lambda_.1} parent=5 // pred_check_branch
        %415 = sbr.rel (%p412) target = $region12
      $region11: #{_lambda_.1} parent=5 // pred_region
        %s416 = ssub.s32 %s25, 1
        // Predicated region
        $region13: #{_lambda_.1} parent=11 // pred_check
          %p417 = pneg %p124
        $region14: #{_lambda_.1} parent=11 // pred_check_branch
          %419 = sbr.rel (%p417) target = $region16
        $region15: #{_lambda_.1} parent=11 // pred_region
          _
        $region16: #{_lambda_.1} parent=11 // pred_fallthru
          _
        // Predicated region
        $region17: #{_lambda_.1} parent=11 // pred_check
          %p420 = pneg %p145
        $region18: #{_lambda_.1} parent=11 // pred_check_branch
          %422 = sbr.rel (%p420) target = $region20
        $region19: #{_lambda_.1} parent=11 // pred_region
          _
        $region20: #{_lambda_.1} parent=11 // pred_fallthru
          _
        // Predicated region
        $region21: #{_lambda_.1} parent=11 // pred_check
          %p423 = pneg %p166
        $region22: #{_lambda_.1} parent=11 // pred_check_branch
          %425 = sbr.rel (%p423) target = $region24
        $region23: #{_lambda_.1} parent=11 // pred_region
          _
        $region24: #{_lambda_.1} parent=11 // pred_fallthru
          _
        // Predicated region
        $region25: #{_lambda_.1} parent=11 // pred_check
          %p426 = pneg %p187
        $region26: #{_lambda_.1} parent=11 // pred_check_branch
          %428 = sbr.rel (%p426) target = $region28
        $region27: #{_lambda_.1} parent=11 // pred_region
          _
        $region28: #{_lambda_.1} parent=11 // pred_fallthru
          _
        // Predicated region
        $region29: #{_lambda_.1} parent=11 // pred_check
          %p429 = pneg %p208
        $region30: #{_lambda_.1} parent=11 // pred_check_branch
          %431 = sbr.rel (%p429) target = $region32
        $region31: #{_lambda_.1} parent=11 // pred_region
          _
        $region32: #{_lambda_.1} parent=11 // pred_fallthru
          _
        // Predicated region
        $region33: #{_lambda_.1} parent=11 // pred_check
          %p432 = pneg %p229
        $region34: #{_lambda_.1} parent=11 // pred_check_branch
          %434 = sbr.rel (%p432) target = $region36
        $region35: #{_lambda_.1} parent=11 // pred_region
          _
        $region36: #{_lambda_.1} parent=11 // pred_fallthru
          _
        // Predicated region
        $region37: #{_lambda_.1} parent=11 // pred_check
          %p435 = pneg %p250
        $region38: #{_lambda_.1} parent=11 // pred_check_branch
          %437 = sbr.rel (%p435) target = $region40
        $region39: #{_lambda_.1} parent=11 // pred_region
          _
        $region40: #{_lambda_.1} parent=11 // pred_fallthru
          _
        // Predicated region
        $region41: #{_lambda_.1} parent=11 // pred_check
          %p438 = pneg %p271
        $region42: #{_lambda_.1} parent=11 // pred_check_branch
          %440 = sbr.rel (%p438) target = $region44
        $region43: #{_lambda_.1} parent=11 // pred_region
          _
        $region44: #{_lambda_.1} parent=11 // pred_fallthru
          _
        // Predicated region
        $region45: #{_lambda_.1} parent=11 // pred_check
          %p441 = pneg %p292
        $region46: #{_lambda_.1} parent=11 // pred_check_branch
          %443 = sbr.rel (%p441) target = $region48
        $region47: #{_lambda_.1} parent=11 // pred_region
          _
        $region48: #{_lambda_.1} parent=11 // pred_fallthru
          _
        // Predicated region
        $region49: #{_lambda_.1} parent=11 // pred_check
          %p444 = pneg %p313
        $region50: #{_lambda_.1} parent=11 // pred_check_branch
          %446 = sbr.rel (%p444) target = $region52
        $region51: #{_lambda_.1} parent=11 // pred_region
          _
        $region52: #{_lambda_.1} parent=11 // pred_fallthru
          _
        // Predicated region
        $region53: #{_lambda_.1} parent=11 // pred_check
          %p447 = pneg %p334
        $region54: #{_lambda_.1} parent=11 // pred_check_branch
          %449 = sbr.rel (%p447) target = $region56
        $region55: #{_lambda_.1} parent=11 // pred_region
          _
        $region56: #{_lambda_.1} parent=11 // pred_fallthru
          _
        // Predicated region
        $region57: #{_lambda_.1} parent=11 // pred_check
          %p450 = pneg %p355
        $region58: #{_lambda_.1} parent=11 // pred_check_branch
          %452 = sbr.rel (%p450) target = $region60
        $region59: #{_lambda_.1} parent=11 // pred_region
          _
        $region60: #{_lambda_.1} parent=11 // pred_fallthru
          _
        // Predicated region
        $region61: #{_lambda_.1} parent=11 // pred_check
          %p453 = pneg %p376
        $region62: #{_lambda_.1} parent=11 // pred_check_branch
          %455 = sbr.rel (%p453) target = $region64
        $region63: #{_lambda_.1} parent=11 // pred_region
          _
        $region64: #{_lambda_.1} parent=11 // pred_fallthru
          _
      $region12: #{_lambda_.1} parent=5 // pred_fallthru
        _
      %p456 = scmp.lt.s32.totalorder %s25, 2
      // Predicated region
      $region65: #{_lambda_.1} parent=5 // pred_check
        %p457 = pneg %p456
      $region66: #{_lambda_.1} parent=5 // pred_check_branch
        %459 = sbr.rel (%p457) target = $region68
      $region67: #{_lambda_.1} parent=5 // pred_region
        // Predicated region
        $region69: #{_lambda_.1} parent=67 // pred_check
          %p460 = pneg %p45
        $region70: #{_lambda_.1} parent=67 // pred_check_branch
          %462 = sbr.rel (%p460) target = $region72
        $region71: #{_lambda_.1} parent=67 // pred_region
          %p463 = scmp.lt.s32.totalorder %s25, 1
          %s464 = scalar_select %p463, %s25, 1
          %s465 = smul.addr %s464, 2
          %s466 = smul.addr %s465, 8
          %s467 = scalar_lea.vmem %s0, %s466
        $region72: #{_lambda_.1} parent=67 // pred_fallthru
          _
        // Predicated region
        $region73: #{_lambda_.1} parent=67 // pred_check
          %p468 = pneg %p71
        $region74: #{_lambda_.1} parent=67 // pred_check_branch
          %470 = sbr.rel (%p468) target = $region76
        $region75: #{_lambda_.1} parent=67 // pred_region
          %p471 = scmp.lt.s32.totalorder %s25, 1
          %s472 = scalar_select %p471, %s25, 1
          %s473 = smul.addr %s472, 2
          %s474 = smul.addr %s473, 8
          %s475 = scalar_lea.vmem %s1, %s474
        $region76: #{_lambda_.1} parent=67 // pred_fallthru
          _
        // Predicated region
        $region77: #{_lambda_.1} parent=67 // pred_check
          %p476 = pneg %p97
        $region78: #{_lambda_.1} parent=67 // pred_check_branch
          %478 = sbr.rel (%p476) target = $region80
        $region79: #{_lambda_.1} parent=67 // pred_region
          %p479 = scmp.lt.s32.totalorder %s25, 1
          %s480 = scalar_select %p479, %s25, 1
          %s481 = smul.addr %s480, 2
          %s482 = scalar_lea.vmem %s2, %s481
        $region80: #{_lambda_.1} parent=67 // pred_fallthru
          _
      $region68: #{_lambda_.1} parent=5 // pred_fallthru
        _
      %p483 = scmp.le.s32.totalorder 1, %s25
      %p484 = scmp.lt.s32.totalorder %s25, 3
      %p485 = pnand %p483, %p484
      %p486 = pneg %p485
      // Predicated region
      $region81: #{_lambda_.1} parent=5 // pred_check
        _
      $region82: #{_lambda_.1} parent=5 // pred_check_branch
        %488 = sbr.rel (%p485) target = $region84
      $region83: #{_lambda_.1} parent=5 // pred_region
        %s489 = ssub.s32 %s25, 1
        %p490 = scmp.lt.s32.totalorder %s30, 1
        %s491 = scalar_select %p490, %s30, 1
        %s492 = smul.addr %s491, 2
        %s493 = smul.addr %s492, 8
        %s494 = scalar_lea.vmem %s0, %s493
        %p495 = pneg %p51
        %p496 = pneg %p48
        %p497 = scmp.lt.s32.totalorder %s30, 1
        %s498 = scalar_select %p497, %s30, 1
        %s499 = smul.addr %s498, 2
        %s500 = smul.addr %s499, 8
        %s501 = scalar_lea.vmem %s1, %s500
        %p502 = pneg %p77
        %p503 = pneg %p74
        %p504 = scmp.lt.s32.totalorder %s30, 1
        %s505 = scalar_select %p504, %s30, 1
        %s506 = smul.addr %s505, 2
        %s507 = scalar_lea.vmem %s2, %s506
        %p508 = pneg %p103
        %p509 = pneg %p100
        %p510 = pneg %p124
        %p511 = pneg %p121
        %p512 = pneg %p145
        %p513 = pneg %p142
        %p514 = pneg %p166
        %p515 = pneg %p163
        %p516 = pneg %p187
        %p517 = pneg %p184
        %p518 = pneg %p208
        %p519 = pneg %p205
        %p520 = pneg %p229
        %p521 = pneg %p226
        %p522 = pneg %p250
        %p523 = pneg %p247
        %p524 = pneg %p271
        %p525 = pneg %p268
        %p526 = pneg %p292
        %p527 = pneg %p289
        %p528 = pneg %p313
        %p529 = pneg %p310
        %p530 = pneg %p334
        %p531 = pneg %p331
        %p532 = pneg %p355
        %p533 = pneg %p352
        %p534 = pneg %p376
        %p535 = pneg %p373
        %p536 = pneg %p402
        %p537 = pneg %p399
        %s538 = sand.u32 %s389, 1
        %s539 = scalar_lea.sflag [#allocation3], %s538
        %s540 = sand.u32 %s389, 1
        %s541 = scalar_lea.vmem [#allocation2], %s540
        %p542 = scmp.lt.s32.totalorder %s30, 1
        %s543 = scalar_select %p542, %s30, 1
        %s544 = smul.addr %s543, 2
        %s545 = smul.addr %s544, 8
        %s546 = scalar_lea.vmem %s0, %s545
        %p547 = scmp.lt.s32.totalorder %s30, 1
        %s548 = scalar_select %p547, %s30, 1
        %s549 = smul.addr %s548, 2
        %s550 = smul.addr %s549, 8
        %s551 = scalar_lea.vmem %s1, %s550
        %p552 = scmp.lt.s32.totalorder %s30, 1
        %s553 = scalar_select %p552, %s30, 1
        %s554 = smul.addr %s553, 2
        %s555 = scalar_lea.vmem %s2, %s554
        %v556 = vld [vmem:[%s546] sm:$0xff]
        %v557 = vld [vmem:[%s546 + $0x8] sm:$0xff]
        %v558 = vld [vmem:[%s551] sm:$0xff]
        %v559 = vld [vmem:[%s551 + $0x8] sm:$0xff]
        %vm560 = vcmp.ne.f32.partialorder %v556, 0.0
        %vm561 = vcmp.ne.f32.partialorder %v557, 0.0
        %v562 = vsel %vm560, 1.0, 0.0
        %v563 = vsel %vm561, 1.0, 0.0
        %v564 = vlaneseq
        %v565 = vshrl.u32 %v564, 7
        %v566 = vadd.s32 %v565, 8
        %v567 = vlaneseq
        %v568 = vand.u32 %v567, 127
        %vm569 = vcmp.eq.s32.totalorder %v565, %v568
        %vm570 = vcmp.eq.s32.totalorder %v566, %v568
        %v571 = vsel %vm569, 1.0, %v562
        %v572 = vsel %vm570, 1.0, %v563
        %vm573 = vcmask 130048
        %v574 = vsel %vm573, %v571, 0.0
        %575 = vadd.xlane.f32.xlu0 %v574
        %v576 = vpop.xlane.xlu0 %575
        %v577 = vsel %vm573, %v572, 0.0
        %578 = vadd.xlane.f32.xlu0 %v577
        %v579 = vpop.xlane.xlu0 %578
        %v580 = vrsqrt.pop %v576
        %v581 = vrsqrt.pop %v579
        %v582 = vmul.f32 %v580, %v571
        %v583 = vmul.f32 %v581, %v572
        %v586 = vlaneseq
        %v587 = vshrl.u32 %v586, 7
        %v588 = vsub.s32 %v568, %v587
        %v589 = vrot.slane %v580, %v588
        %v590 = vadd.s32 %v568, 4294967288
        %v591 = vlaneseq
        %v592 = vshrl.u32 %v591, 7
        %v593 = vsub.s32 %v590, %v592
        %v594 = vrot.slane %v581, %v593
        %vm595 = vcmask 130112
        %v596 = vsel %vm595, %v594, %v589
        %vm597 = vcmask 1042434
        %v598 = vsel %vm597, %v596, %v596
        %vm599 = vcmask 1043459
        %v600 = vsel %vm599, %v596, %v598
        %vm601 = vcmask 1044484
        %v602 = vsel %vm601, %v596, %v600
        %vm603 = vcmask 1045509
        %v604 = vsel %vm603, %v596, %v602
        %vm605 = vcmask 1046534
        %v606 = vsel %vm605, %v596, %v604
        %vm607 = vcmask 1047559
        %v608 = vsel %vm607, %v596, %v606
        %v610 = vmul.f32 %v582, %v608
        %v611 = vmul.f32 %v583, %v608
        %v612 = vld [vmem:[%s3] sm:$0xff]
        %v613 = vld [vmem:[%s3 + $0x8] sm:$0xff]
        %v614 = vld [vmem:[%s4] sm:$0x1]
        %v616 = vsel %vm573, %v558, 0
        %v619 = vsel %vm573, %v559, 0
        %621 = vmatprep.subr.mxu0 0.0
        %622 = vmatpush1.msra.mxu0 %v612
        %623 = vmatprep.subr.mxu0 0.0
        %624 = vmatpush1.msra.mxu0 %v613
        %625 = vmatprep.subr.mxu0 0.0
        %626 = vmatpush1.msra.mxu0 0.0
        %627 = vmatprep.subr.mxu0 0.0
        %628 = vmatpush1.msra.mxu0 0.0
        %629 = vmatprep.subr.mxu0 0.0
        %630 = vmatpush1.msra.mxu0 0.0
        %631 = vmatprep.subr.mxu0 0.0
        %632 = vmatpush1.msra.mxu0 0.0
        %633 = vmatprep.subr.mxu0 0.0
        %634 = vmatpush1.msra.mxu0 0.0
        %635 = vmatprep.subr.mxu0 0.0
        %636 = vmatpush1.msra.mxu0 0.0
        %637 = vmatprep.subr.mxu0 0.0
        %638 = vmatpush1.msra.mxu0 0.0
        %639 = vmatprep.subr.mxu0 0.0
        %640 = vmatpush1.msra.mxu0 0.0
        %641 = vmatprep.subr.mxu0 0.0
        %642 = vmatpush1.msra.mxu0 0.0
        %643 = vmatprep.subr.mxu0 0.0
        %644 = vmatpush1.msra.mxu0 0.0
        %645 = vmatprep.subr.mxu0 0.0
        %646 = vmatpush1.msra.mxu0 0.0
        %647 = vmatprep.subr.mxu0 0.0
        %648 = vmatpush1.msra.mxu0 0.0
        %649 = vmatprep.subr.mxu0 0.0
        %650 = vmatpush1.msra.mxu0 0.0
        %651 = vmatprep.subr.mxu0 0.0
        %652 = vmatpush1.msra.mxu0 0.0
        %653 = vmatprep.subr.mxu0 0.0
        %654 = vmatpush1.msra.mxu0 0.0
        %655 = vmatprep.subr.mxu0 0.0
        %656 = vmatpush1.msra.mxu0 0.0
        %657 = vmatprep.subr.mxu0 0.0
        %658 = vmatpush1.msra.mxu0 0.0
        %659 = vmatprep.subr.mxu0 0.0
        %660 = vmatpush1.msra.mxu0 0.0
        %661 = vmatprep.subr.mxu0 0.0
        %662 = vmatpush1.msra.mxu0 0.0
        %663 = vmatprep.subr.mxu0 0.0
        %664 = vmatpush1.msra.mxu0 0.0
        %665 = vmatprep.subr.mxu0 0.0
        %666 = vmatpush1.msra.mxu0 0.0
        %667 = vmatprep.subr.mxu0 0.0
        %668 = vmatpush1.msra.mxu0 0.0
        %669 = vmatprep.subr.mxu0 0.0
        %670 = vmatpush1.msra.mxu0 0.0
        %671 = vmatprep.subr.mxu0 0.0
        %672 = vmatpush1.msra.mxu0 0.0
        %673 = vmatprep.subr.mxu0 0.0
        %674 = vmatpush1.msra.mxu0 0.0
        %675 = vmatprep.subr.mxu0 0.0
        %676 = vmatpush1.msra.mxu0 0.0
        %677 = vmatprep.subr.mxu0 0.0
        %678 = vmatpush1.msra.mxu0 0.0
        %679 = vmatprep.subr.mxu0 0.0
        %680 = vmatpush1.msra.mxu0 0.0
        %681 = vmatprep.subr.mxu0 0.0
        %682 = vmatpush1.msra.mxu0 0.0
        %683 = vmatprep.subr.mxu0 0.0
        %684 = vmatpush1.msra.mxu0 0.0
        %685 = vmatprep.mubr.f32.mxu0 0.0
        %686 = vmatmul.mubr.f32.gmra.mrb[0].mxu0 %v616
        %v687 = vpop.f32.mrb[0].mxu0
        %v688 = vadd.f32 0.0, %v687
        %v689 = vpop.f32.mrb[0].mxu0
        %690 = vmatprep.mubr.f32.mxu0 0.0
        %691 = vmatmul.mubr.f32.gmra.mrb[0].mxu0 %v619
        %v692 = vpop.f32.mrb[0].mxu0
        %v693 = vadd.f32 0.0, %v692
        %v694 = vpop.f32.mrb[0].mxu0
        %695 = vdwg.mxu0
        %v697 = vlaneseq
        %v698 = vshrl.u32 %v697, 7
        %v699 = vsub.s32 0, %v698
        %v700 = vrot.slane %v614, %v699
        %v703 = vsel %vm573, %v610, 0
        %v706 = vsel %vm573, %v611, 0
        %708 = vmatprep.subr.mxu0 0.0
        %709 = vmatpush1.msra.mxu0 %v688
        %710 = vmatprep.subr.mxu0 0.0
        %711 = vmatpush1.msra.mxu0 %v693
        %712 = vmatprep.subr.mxu0 0.0
        %713 = vmatpush1.msra.mxu0 0.0
        %714 = vmatprep.subr.mxu0 0.0
        %715 = vmatpush1.msra.mxu0 0.0
        %716 = vmatprep.subr.mxu0 0.0
        %717 = vmatpush1.msra.mxu0 0.0
        %718 = vmatprep.subr.mxu0 0.0
        %719 = vmatpush1.msra.mxu0 0.0
        %720 = vmatprep.subr.mxu0 0.0
        %721 = vmatpush1.msra.mxu0 0.0
        %722 = vmatprep.subr.mxu0 0.0
        %723 = vmatpush1.msra.mxu0 0.0
        %724 = vmatprep.subr.mxu0 0.0
        %725 = vmatpush1.msra.mxu0 0.0
        %726 = vmatprep.subr.mxu0 0.0
        %727 = vmatpush1.msra.mxu0 0.0
        %728 = vmatprep.subr.mxu0 0.0
        %729 = vmatpush1.msra.mxu0 0.0
        %730 = vmatprep.subr.mxu0 0.0
        %731 = vmatpush1.msra.mxu0 0.0
        %732 = vmatprep.subr.mxu0 0.0
        %733 = vmatpush1.msra.mxu0 0.0
        %734 = vmatprep.subr.mxu0 0.0
        %735 = vmatpush1.msra.mxu0 0.0
        %736 = vmatprep.subr.mxu0 0.0
        %737 = vmatpush1.msra.mxu0 0.0
        %738 = vmatprep.subr.mxu0 0.0
        %739 = vmatpush1.msra.mxu0 0.0
        %740 = vmatprep.subr.mxu0 0.0
        %741 = vmatpush1.msra.mxu0 0.0
        %742 = vmatprep.subr.mxu0 0.0
        %743 = vmatpush1.msra.mxu0 0.0
        %744 = vmatprep.subr.mxu0 0.0
        %745 = vmatpush1.msra.mxu0 0.0
        %746 = vmatprep.subr.mxu0 0.0
        %747 = vmatpush1.msra.mxu0 0.0
        %748 = vmatprep.subr.mxu0 0.0
        %749 = vmatpush1.msra.mxu0 0.0
        %750 = vmatprep.subr.mxu0 0.0
        %751 = vmatpush1.msra.mxu0 0.0
        %752 = vmatprep.subr.mxu0 0.0
        %753 = vmatpush1.msra.mxu0 0.0
        %754 = vmatprep.subr.mxu0 0.0
        %755 = vmatpush1.msra.mxu0 0.0
        %756 = vmatprep.subr.mxu0 0.0
        %757 = vmatpush1.msra.mxu0 0.0
        %758 = vmatprep.subr.mxu0 0.0
        %759 = vmatpush1.msra.mxu0 0.0
        %760 = vmatprep.subr.mxu0 0.0
        %761 = vmatpush1.msra.mxu0 0.0
        %762 = vmatprep.subr.mxu0 0.0
        %763 = vmatpush1.msra.mxu0 0.0
        %764 = vmatprep.subr.mxu0 0.0
        %765 = vmatpush1.msra.mxu0 0.0
        %766 = vmatprep.subr.mxu0 0.0
        %767 = vmatpush1.msra.mxu0 0.0
        %768 = vmatprep.subr.mxu0 0.0
        %769 = vmatpush1.msra.mxu0 0.0
        %770 = vmatprep.subr.mxu0 0.0
        %771 = vmatpush1.msra.mxu0 0.0
        %772 = vmatprep.mubr.f32.mxu0 0.0
        %773 = vmatmul.mubr.f32.gmra.mrb[0].mxu0 %v703
        %v774 = vpop.f32.mrb[0].mxu0
        %v775 = vadd.f32 %v700, %v774
        %v776 = vpop.f32.mrb[0].mxu0
        %777 = vmatprep.mubr.f32.mxu0 0.0
        %778 = vmatmul.mubr.f32.gmra.mrb[0].mxu0 %v706
        %v779 = vpop.f32.mrb[0].mxu0
        %v780 = vadd.f32 %v700, %v779
        %v781 = vpop.f32.mrb[0].mxu0
        %782 = vdwg.mxu0
        %v783 = vtanh.pop %v775
        %v784 = vtanh.pop %v780
        %vm785 = vcmask 261120
        %v786 = vsel %vm785, %v783, 0.0
        %v787 = vsel %vm785, %v784, 0.0
        %v788 = vadd.f32 %v786, %v787
        %v789 = vrot.slane %v788, 4
        %v790 = vadd.f32 %v788, %v789
        %v791 = vrot.slane %v790, 2
        %v792 = vadd.f32 %v790, %v791
        %v793 = vrot.slane %v792, 1
        %v794 = vadd.f32 %v792, %v793
        %v795 = vmul.f32 %v794, 0.0625
        %v796 = vld [vmem:[%s5] sm:$0xff]
        %v797 = vld [vmem:[%s5 + $0x8] sm:$0xff]
        %v798 = vld [vmem:[%s5 + $0x10] sm:$0xff]
        %v799 = vld [vmem:[%s5 + $0x18] sm:$0xff]
        %v800 = vld [vmem:[%s6] sm:$0x1]
        %v802 = vsel %vm785, %v783, 0
        %v805 = vsel %vm785, %v784, 0
        %807 = vmatprep.subr.mxu0 0.0
        %808 = vmatpush1.msra.mxu0 %v796
        %809 = vmatprep.subr.mxu0 0.0
        %810 = vmatpush1.msra.mxu0 %v797
        %811 = vmatprep.subr.mxu0 0.0
        %812 = vmatpush1.msra.mxu0 %v798
        %813 = vmatprep.subr.mxu0 0.0
        %814 = vmatpush1.msra.mxu0 %v799
        %815 = vmatprep.subr.mxu0 0.0
        %816 = vmatpush1.msra.mxu0 0.0
        %817 = vmatprep.subr.mxu0 0.0
        %818 = vmatpush1.msra.mxu0 0.0
        %819 = vmatprep.subr.mxu0 0.0
        %820 = vmatpush1.msra.mxu0 0.0
        %821 = vmatprep.subr.mxu0 0.0
        %822 = vmatpush1.msra.mxu0 0.0
        %823 = vmatprep.subr.mxu0 0.0
        %824 = vmatpush1.msra.mxu0 0.0
        %825 = vmatprep.subr.mxu0 0.0
        %826 = vmatpush1.msra.mxu0 0.0
        %827 = vmatprep.subr.mxu0 0.0
        %828 = vmatpush1.msra.mxu0 0.0
        %829 = vmatprep.subr.mxu0 0.0
        %830 = vmatpush1.msra.mxu0 0.0
        %831 = vmatprep.subr.mxu0 0.0
        %832 = vmatpush1.msra.mxu0 0.0
        %833 = vmatprep.subr.mxu0 0.0
        %834 = vmatpush1.msra.mxu0 0.0
        %835 = vmatprep.subr.mxu0 0.0
        %836 = vmatpush1.msra.mxu0 0.0
        %837 = vmatprep.subr.mxu0 0.0
        %838 = vmatpush1.msra.mxu0 0.0
        %839 = vmatprep.subr.mxu0 0.0
        %840 = vmatpush1.msra.mxu0 0.0
        %841 = vmatprep.subr.mxu0 0.0
        %842 = vmatpush1.msra.mxu0 0.0
        %843 = vmatprep.subr.mxu0 0.0
        %844 = vmatpush1.msra.mxu0 0.0
        %845 = vmatprep.subr.mxu0 0.0
        %846 = vmatpush1.msra.mxu0 0.0
        %847 = vmatprep.subr.mxu0 0.0
        %848 = vmatpush1.msra.mxu0 0.0
        %849 = vmatprep.subr.mxu0 0.0
        %850 = vmatpush1.msra.mxu0 0.0
        %851 = vmatprep.subr.mxu0 0.0
        %852 = vmatpush1.msra.mxu0 0.0
        %853 = vmatprep.subr.mxu0 0.0
        %854 = vmatpush1.msra.mxu0 0.0
        %855 = vmatprep.subr.mxu0 0.0
        %856 = vmatpush1.msra.mxu0 0.0
        %857 = vmatprep.subr.mxu0 0.0
        %858 = vmatpush1.msra.mxu0 0.0
        %859 = vmatprep.subr.mxu0 0.0
        %860 = vmatpush1.msra.mxu0 0.0
        %861 = vmatprep.subr.mxu0 0.0
        %862 = vmatpush1.msra.mxu0 0.0
        %863 = vmatprep.subr.mxu0 0.0
        %864 = vmatpush1.msra.mxu0 0.0
        %865 = vmatprep.subr.mxu0 0.0
        %866 = vmatpush1.msra.mxu0 0.0
        %867 = vmatprep.subr.mxu0 0.0
        %868 = vmatpush1.msra.mxu0 0.0
        %869 = vmatprep.subr.mxu0 0.0
        %870 = vmatpush1.msra.mxu0 0.0
        %871 = vmatprep.mubr.f32.mxu0 0.0
        %872 = vmatmul.mubr.f32.gmra.mrb[0].mxu0 %v802
        %v873 = vpop.f32.mrb[0].mxu0
        %v874 = vadd.f32 0.0, %v873
        %v875 = vpop.f32.mrb[0].mxu0
        %876 = vmatprep.mubr.f32.mxu0 0.0
        %877 = vmatmul.mubr.f32.gmra.mrb[0].mxu0 %v805
        %v878 = vpop.f32.mrb[0].mxu0
        %v879 = vadd.f32 0.0, %v878
        %v880 = vpop.f32.mrb[0].mxu0
        %881 = vdwg.mxu0
        %v883 = vlaneseq
        %v884 = vshrl.u32 %v883, 7
        %v885 = vsub.s32 0, %v884
        %v886 = vrot.slane %v800, %v885
        %888 = vmatprep.subr.mxu0 0.0
        %889 = vmatpush1.msra.mxu0 %v874
        %890 = vmatprep.subr.mxu0 0.0
        %891 = vmatpush1.msra.mxu0 %v879
        %892 = vmatprep.subr.mxu0 0.0
        %893 = vmatpush1.msra.mxu0 0.0
        %894 = vmatprep.subr.mxu0 0.0
        %895 = vmatpush1.msra.mxu0 0.0
        %896 = vmatprep.subr.mxu0 0.0
        %897 = vmatpush1.msra.mxu0 0.0
        %898 = vmatprep.subr.mxu0 0.0
        %899 = vmatpush1.msra.mxu0 0.0
        %900 = vmatprep.subr.mxu0 0.0
        %901 = vmatpush1.msra.mxu0 0.0
        %902 = vmatprep.subr.mxu0 0.0
        %903 = vmatpush1.msra.mxu0 0.0
        %904 = vmatprep.subr.mxu0 0.0
        %905 = vmatpush1.msra.mxu0 0.0
        %906 = vmatprep.subr.mxu0 0.0
        %907 = vmatpush1.msra.mxu0 0.0
        %908 = vmatprep.subr.mxu0 0.0
        %909 = vmatpush1.msra.mxu0 0.0
        %910 = vmatprep.subr.mxu0 0.0
        %911 = vmatpush1.msra.mxu0 0.0
        %912 = vmatprep.subr.mxu0 0.0
        %913 = vmatpush1.msra.mxu0 0.0
        %914 = vmatprep.subr.mxu0 0.0
        %915 = vmatpush1.msra.mxu0 0.0
        %916 = vmatprep.subr.mxu0 0.0
        %917 = vmatpush1.msra.mxu0 0.0
        %918 = vmatprep.subr.mxu0 0.0
        %919 = vmatpush1.msra.mxu0 0.0
        %920 = vmatprep.subr.mxu0 0.0
        %921 = vmatpush1.msra.mxu0 0.0
        %922 = vmatprep.subr.mxu0 0.0
        %923 = vmatpush1.msra.mxu0 0.0
        %924 = vmatprep.subr.mxu0 0.0
        %925 = vmatpush1.msra.mxu0 0.0
        %926 = vmatprep.subr.mxu0 0.0
        %927 = vmatpush1.msra.mxu0 0.0
        %928 = vmatprep.subr.mxu0 0.0
        %929 = vmatpush1.msra.mxu0 0.0
        %930 = vmatprep.subr.mxu0 0.0
        %931 = vmatpush1.msra.mxu0 0.0
        %932 = vmatprep.subr.mxu0 0.0
        %933 = vmatpush1.msra.mxu0 0.0
        %934 = vmatprep.subr.mxu0 0.0
        %935 = vmatpush1.msra.mxu0 0.0
        %936 = vmatprep.subr.mxu0 0.0
        %937 = vmatpush1.msra.mxu0 0.0
        %938 = vmatprep.subr.mxu0 0.0
        %939 = vmatpush1.msra.mxu0 0.0
        %940 = vmatprep.subr.mxu0 0.0
        %941 = vmatpush1.msra.mxu0 0.0
        %942 = vmatprep.subr.mxu0 0.0
        %943 = vmatpush1.msra.mxu0 0.0
        %944 = vmatprep.subr.mxu0 0.0
        %945 = vmatpush1.msra.mxu0 0.0
        %946 = vmatprep.subr.mxu0 0.0
        %947 = vmatpush1.msra.mxu0 0.0
        %948 = vmatprep.subr.mxu0 0.0
        %949 = vmatpush1.msra.mxu0 0.0
        %950 = vmatprep.subr.mxu0 0.0
        %951 = vmatpush1.msra.mxu0 0.0
        %952 = vmatprep.mubr.f32.mxu0 0.0
        %953 = vmatmul.mubr.f32.gmra.mrb[0].mxu0 %v703
        %v954 = vpop.f32.mrb[0].mxu0
        %v955 = vadd.f32 %v886, %v954
        %v956 = vpop.f32.mrb[0].mxu0
        %957 = vmatprep.mubr.f32.mxu0 0.0
        %958 = vmatmul.mubr.f32.gmra.mrb[0].mxu0 %v706
        %v959 = vpop.f32.mrb[0].mxu0
        %v960 = vadd.f32 %v886, %v959
        %v961 = vpop.f32.mrb[0].mxu0
        %962 = vdwg.mxu0
        %v963 = vtanh.pop %v955
        %v964 = vtanh.pop %v960
        %v965 = vsel %vm785, %v963, 0.0
        %v966 = vsel %vm785, %v964, 0.0
        %v967 = vadd.f32 %v965, %v966
        %v968 = vrot.slane %v967, 4
        %v969 = vadd.f32 %v967, %v968
        %v970 = vrot.slane %v969, 2
        %v971 = vadd.f32 %v969, %v970
        %v972 = vrot.slane %v971, 1
        %v973 = vadd.f32 %v971, %v972
        %v974 = vmul.f32 %v973, 0.0625
        %976 = vrot.lane.b32.xlu0 %v974, 32
        %v977 = vpop.permute.xlu0 %976
        %v979 = vsel %vm785, %v795, %v977
        %v980 = vld [vmem:[%s8] sm:$0xff]
        %v981 = vld [vmem:[%s8 + $0x8] sm:$0xff]
        %v982 = vld [vmem:[%s8 + $0x10] sm:$0xff]
        %v983 = vld [vmem:[%s8 + $0x18] sm:$0xff]
        %v984 = vld [vmem:[%s8 + $0x20] sm:$0xff]
        %v985 = vld [vmem:[%s8 + $0x28] sm:$0xff]
        %v986 = vld [vmem:[%s8 + $0x30] sm:$0xff]
        %v987 = vld [vmem:[%s8 + $0x38] sm:$0xff]
        %v988 = vld [vmem:[%s9] sm:$0x1]
        %vm989 = vcmask 523264
        %v991 = vsel %vm989, %v979, 0
        %993 = vmatprep.subr.mxu0 0.0
        %994 = vmatpush1.msra.mxu0 %v980
        %995 = vmatprep.subr.mxu0 0.0
        %996 = vmatpush1.msra.mxu0 %v981
        %997 = vmatprep.subr.mxu0 0.0
        %998 = vmatpush1.msra.mxu0 %v982
        %999 = vmatprep.subr.mxu0 0.0
        %1000 = vmatpush1.msra.mxu0 %v983
        %1001 = vmatprep.subr.mxu0 0.0
        %1002 = vmatpush1.msra.mxu0 %v984
        %1003 = vmatprep.subr.mxu0 0.0
        %1004 = vmatpush1.msra.mxu0 %v985
        %1005 = vmatprep.subr.mxu0 0.0
        %1006 = vmatpush1.msra.mxu0 %v986
        %1007 = vmatprep.subr.mxu0 0.0
        %1008 = vmatpush1.msra.mxu0 %v987
        %1009 = vmatprep.subr.mxu0 0.0
        %1010 = vmatpush1.msra.mxu0 0.0
        %1011 = vmatprep.subr.mxu0 0.0
        %1012 = vmatpush1.msra.mxu0 0.0
        %1013 = vmatprep.subr.mxu0 0.0
        %1014 = vmatpush1.msra.mxu0 0.0
        %1015 = vmatprep.subr.mxu0 0.0
        %1016 = vmatpush1.msra.mxu0 0.0
        %1017 = vmatprep.subr.mxu0 0.0
        %1018 = vmatpush1.msra.mxu0 0.0
        %1019 = vmatprep.subr.mxu0 0.0
        %1020 = vmatpush1.msra.mxu0 0.0
        %1021 = vmatprep.subr.mxu0 0.0
        %1022 = vmatpush1.msra.mxu0 0.0
        %1023 = vmatprep.subr.mxu0 0.0
        %1024 = vmatpush1.msra.mxu0 0.0
        %1025 = vmatprep.subr.mxu0 0.0
        %1026 = vmatpush1.msra.mxu0 0.0
        %1027 = vmatprep.subr.mxu0 0.0
        %1028 = vmatpush1.msra.mxu0 0.0
        %1029 = vmatprep.subr.mxu0 0.0
        %1030 = vmatpush1.msra.mxu0 0.0
        %1031 = vmatprep.subr.mxu0 0.0
        %1032 = vmatpush1.msra.mxu0 0.0
        %1033 = vmatprep.subr.mxu0 0.0
        %1034 = vmatpush1.msra.mxu0 0.0
        %1035 = vmatprep.subr.mxu0 0.0
        %1036 = vmatpush1.msra.mxu0 0.0
        %1037 = vmatprep.subr.mxu0 0.0
        %1038 = vmatpush1.msra.mxu0 0.0
        %1039 = vmatprep.subr.mxu0 0.0
        %1040 = vmatpush1.msra.mxu0 0.0
        %1041 = vmatprep.subr.mxu0 0.0
        %1042 = vmatpush1.msra.mxu0 0.0
        %1043 = vmatprep.subr.mxu0 0.0
        %1044 = vmatpush1.msra.mxu0 0.0
        %1045 = vmatprep.subr.mxu0 0.0
        %1046 = vmatpush1.msra.mxu0 0.0
        %1047 = vmatprep.subr.mxu0 0.0
        %1048 = vmatpush1.msra.mxu0 0.0
        %1049 = vmatprep.subr.mxu0 0.0
        %1050 = vmatpush1.msra.mxu0 0.0
        %1051 = vmatprep.subr.mxu0 0.0
        %1052 = vmatpush1.msra.mxu0 0.0
        %1053 = vmatprep.subr.mxu0 0.0
        %1054 = vmatpush1.msra.mxu0 0.0
        %1055 = vmatprep.subr.mxu0 0.0
        %1056 = vmatpush1.msra.mxu0 0.0
        %1057 = vmatprep.mubr.f32.mxu0 0.0
        %1058 = vmatmul.mubr.f32.gmra.mrb[0].mxu0 %v991
        %v1059 = vpop.f32.mrb[0].mxu0
        %v1060 = vadd.f32 %v988, %v1059
        %v1061 = vpop.f32.mrb[0].mxu0
        %1062 = vdwg.mxu0
        %v1063 = vld [vmem:[%s555] sm:$0x3]
        %v1064 = vld [vmem:[%s7] sm:$0xff]
        %v1065 = vld [vmem:[%s7 + $0x8] sm:$0xff]
        %v1066 = vld [vmem:[%s7 + $0x10] sm:$0xff]
        %v1067 = vld [vmem:[%s7 + $0x18] sm:$0xff]
        %v1068 = vld [vmem:[%s7 + $0x20] sm:$0xff]
        %v1069 = vld [vmem:[%s7 + $0x28] sm:$0xff]
        %v1070 = vld [vmem:[%s7 + $0x30] sm:$0xff]
        %v1071 = vld [vmem:[%s7 + $0x38] sm:$0xff]
        %v1072 = vld [vmem:[%s7 + $0x40] sm:$0xff]
        %v1073 = vld [vmem:[%s7 + $0x48] sm:$0xff]
        %v1074 = vld [vmem:[%s7 + $0x50] sm:$0xff]
        %v1075 = vld [vmem:[%s7 + $0x58] sm:$0xff]
        %v1076 = vld [vmem:[%s7 + $0x60] sm:$0xff]
        %v1077 = vld [vmem:[%s7 + $0x68] sm:$0xff]
        %v1078 = vld [vmem:[%s7 + $0x70] sm:$0xff]
        %v1079 = vld [vmem:[%s7 + $0x78] sm:$0xff]
        %v1080 = vld [vmem:[%s7 + $0x80] sm:$0xff]
        %v1081 = vld [vmem:[%s7 + $0x88] sm:$0xff]
        %v1082 = vld [vmem:[%s7 + $0x90] sm:$0xff]
        %v1083 = vld [vmem:[%s7 + $0x98] sm:$0xff]
        %v1084 = vld [vmem:[%s7 + $0xa0] sm:$0xff]
        %v1085 = vld [vmem:[%s7 + $0xa8] sm:$0xff]
        %v1086 = vld [vmem:[%s7 + $0xb0] sm:$0xff]
        %v1087 = vld [vmem:[%s7 + $0xb8] sm:$0xff]
        %v1088 = vld [vmem:[%s7 + $0xc0] sm:$0xff]
        %v1089 = vld [vmem:[%s7 + $0xc8] sm:$0xff]
        %v1090 = vld [vmem:[%s7 + $0xd0] sm:$0xff]
        %v1091 = vld [vmem:[%s7 + $0xd8] sm:$0xff]
        %v1092 = vld [vmem:[%s7 + $0xe0] sm:$0xff]
        %v1093 = vld [vmem:[%s7 + $0xe8] sm:$0xff]
        %v1094 = vld [vmem:[%s7 + $0xf0] sm:$0xff]
        %v1095 = vld [vmem:[%s7 + $0xf8] sm:$0xff]
        %v1097 = vlaneseq
        %v1098 = vshrl.u32 %v1097, 7
        %v1099 = vsub.s32 0, %v1098
        %v1100 = vrot.slane %v1063, %v1099
        %v1101 = vlaneseq
        %v1102 = vshrl.u32 %v1101, 7
        %v1103 = vsub.s32 1, %v1102
        %v1104 = vrot.slane %v1063, %v1103
        %1107 = vmatprep.subr.mxu0 0.0
        %1108 = vmatpush1.msra.mxu0 %v1064
        %1109 = vmatprep.subr.mxu0 0.0
        %1110 = vmatpush1.msra.mxu0 %v1065
        %1111 = vmatprep.subr.mxu0 0.0
        %1112 = vmatpush1.msra.mxu0 %v1066
        %1113 = vmatprep.subr.mxu0 0.0
        %1114 = vmatpush1.msra.mxu0 %v1067
        %1115 = vmatprep.subr.mxu0 0.0
        %1116 = vmatpush1.msra.mxu0 %v1068
        %1117 = vmatprep.subr.mxu0 0.0
        %1118 = vmatpush1.msra.mxu0 %v1069
        %1119 = vmatprep.subr.mxu0 0.0
        %1120 = vmatpush1.msra.mxu0 %v1070
        %1121 = vmatprep.subr.mxu0 0.0
        %1122 = vmatpush1.msra.mxu0 %v1071
        %1123 = vmatprep.subr.mxu0 0.0
        %1124 = vmatpush1.msra.mxu0 %v1072
        %1125 = vmatprep.subr.mxu0 0.0
        %1126 = vmatpush1.msra.mxu0 %v1073
        %1127 = vmatprep.subr.mxu0 0.0
        %1128 = vmatpush1.msra.mxu0 %v1074
        %1129 = vmatprep.subr.mxu0 0.0
        %1130 = vmatpush1.msra.mxu0 %v1075
        %1131 = vmatprep.subr.mxu0 0.0
        %1132 = vmatpush1.msra.mxu0 %v1076
        %1133 = vmatprep.subr.mxu0 0.0
        %1134 = vmatpush1.msra.mxu0 %v1077
        %1135 = vmatprep.subr.mxu0 0.0
        %1136 = vmatpush1.msra.mxu0 %v1078
        %1137 = vmatprep.subr.mxu0 0.0
        %1138 = vmatpush1.msra.mxu0 %v1079
        %1139 = vmatprep.subr.mxu0 0.0
        %1140 = vmatpush1.msra.mxu0 %v1080
        %1141 = vmatprep.subr.mxu0 0.0
        %1142 = vmatpush1.msra.mxu0 %v1081
        %1143 = vmatprep.subr.mxu0 0.0
        %1144 = vmatpush1.msra.mxu0 %v1082
        %1145 = vmatprep.subr.mxu0 0.0
        %1146 = vmatpush1.msra.mxu0 %v1083
        %1147 = vmatprep.subr.mxu0 0.0
        %1148 = vmatpush1.msra.mxu0 %v1084
        %1149 = vmatprep.subr.mxu0 0.0
        %1150 = vmatpush1.msra.mxu0 %v1085
        %1151 = vmatprep.subr.mxu0 0.0
        %1152 = vmatpush1.msra.mxu0 %v1086
        %1153 = vmatprep.subr.mxu0 0.0
        %1154 = vmatpush1.msra.mxu0 %v1087
        %1155 = vmatprep.subr.mxu0 0.0
        %1156 = vmatpush1.msra.mxu0 %v1088
        %1157 = vmatprep.subr.mxu0 0.0
        %1158 = vmatpush1.msra.mxu0 %v1089
        %1159 = vmatprep.subr.mxu0 0.0
        %1160 = vmatpush1.msra.mxu0 %v1090
        %1161 = vmatprep.subr.mxu0 0.0
        %1162 = vmatpush1.msra.mxu0 %v1091
        %1163 = vmatprep.subr.mxu0 0.0
        %1164 = vmatpush1.msra.mxu0 %v1092
        %1165 = vmatprep.subr.mxu0 0.0
        %1166 = vmatpush1.msra.mxu0 %v1093
        %1167 = vmatprep.subr.mxu0 0.0
        %1168 = vmatpush1.msra.mxu0 %v1094
        %1169 = vmatprep.subr.mxu0 0.0
        %1170 = vmatpush1.msra.mxu0 %v1095
        %1171 = vmatprep.mubr.f32.mxu0 %v1104
        %1172 = vmatmul.mubr.f32.gmra.mrb[0].mxu0 %v1100
        %v1173 = vpop.f32.mrb[0].mxu0
        %v1174 = vadd.f32 0.0, %v1173
        %v1175 = vpop.f32.mrb[0].mxu0
        %1176 = vdwg.mxu0
        %v1177 = vadd.f32 %v1060, %v1174
        %v1178 = vmax.f32 %v1177, 0.0
        %v1179 = vld [vmem:[%s10] sm:$0xff]
        %v1180 = vld [vmem:[%s10 + $0x8] sm:$0xff]
        %v1181 = vld [vmem:[%s10 + $0x10] sm:$0xff]
        %v1182 = vld [vmem:[%s10 + $0x18] sm:$0xff]
        %v1183 = vld [vmem:[%s11] sm:$0x1]
        %v1185 = vsel %vm785, %v1178, 0
        %1187 = vmatprep.subr.mxu0 0.0
        %1188 = vmatpush1.msra.mxu0 %v1179
        %1189 = vmatprep.subr.mxu0 0.0
        %1190 = vmatpush1.msra.mxu0 %v1180
        %1191 = vmatprep.subr.mxu0 0.0
        %1192 = vmatpush1.msra.mxu0 %v1181
        %1193 = vmatprep.subr.mxu0 0.0
        %1194 = vmatpush1.msra.mxu0 %v1182
        %1195 = vmatprep.subr.mxu0 0.0
        %1196 = vmatpush1.msra.mxu0 0.0
        %1197 = vmatprep.subr.mxu0 0.0
        %1198 = vmatpush1.msra.mxu0 0.0
        %1199 = vmatprep.subr.mxu0 0.0
        %1200 = vmatpush1.msra.mxu0 0.0
        %1201 = vmatprep.subr.mxu0 0.0
        %1202 = vmatpush1.msra.mxu0 0.0
        %1203 = vmatprep.subr.mxu0 0.0
        %1204 = vmatpush1.msra.mxu0 0.0
        %1205 = vmatprep.subr.mxu0 0.0
        %1206 = vmatpush1.msra.mxu0 0.0
        %1207 = vmatprep.subr.mxu0 0.0
        %1208 = vmatpush1.msra.mxu0 0.0
        %1209 = vmatprep.subr.mxu0 0.0
        %1210 = vmatpush1.msra.mxu0 0.0
        %1211 = vmatprep.subr.mxu0 0.0
        %1212 = vmatpush1.msra.mxu0 0.0
        %1213 = vmatprep.subr.mxu0 0.0
        %1214 = vmatpush1.msra.mxu0 0.0
        %1215 = vmatprep.subr.mxu0 0.0
        %1216 = vmatpush1.msra.mxu0 0.0
        %1217 = vmatprep.subr.mxu0 0.0
        %1218 = vmatpush1.msra.mxu0 0.0
        %1219 = vmatprep.subr.mxu0 0.0
        %1220 = vmatpush1.msra.mxu0 0.0
        %1221 = vmatprep.subr.mxu0 0.0
        %1222 = vmatpush1.msra.mxu0 0.0
        %1223 = vmatprep.subr.mxu0 0.0
        %1224 = vmatpush1.msra.mxu0 0.0
        %1225 = vmatprep.subr.mxu0 0.0
        %1226 = vmatpush1.msra.mxu0 0.0
        %1227 = vmatprep.subr.mxu0 0.0
        %1228 = vmatpush1.msra.mxu0 0.0
        %1229 = vmatprep.subr.mxu0 0.0
        %1230 = vmatpush1.msra.mxu0 0.0
        %1231 = vmatprep.subr.mxu0 0.0
        %1232 = vmatpush1.msra.mxu0 0.0
        %1233 = vmatprep.subr.mxu0 0.0
        %1234 = vmatpush1.msra.mxu0 0.0
        %1235 = vmatprep.subr.mxu0 0.0
        %1236 = vmatpush1.msra.mxu0 0.0
        %1237 = vmatprep.subr.mxu0 0.0
        %1238 = vmatpush1.msra.mxu0 0.0
        %1239 = vmatprep.subr.mxu0 0.0
        %1240 = vmatpush1.msra.mxu0 0.0
        %1241 = vmatprep.subr.mxu0 0.0
        %1242 = vmatpush1.msra.mxu0 0.0
        %1243 = vmatprep.subr.mxu0 0.0
        %1244 = vmatpush1.msra.mxu0 0.0
        %1245 = vmatprep.subr.mxu0 0.0
        %1246 = vmatpush1.msra.mxu0 0.0
        %1247 = vmatprep.subr.mxu0 0.0
        %1248 = vmatpush1.msra.mxu0 0.0
        %1249 = vmatprep.subr.mxu0 0.0
        %1250 = vmatpush1.msra.mxu0 0.0
        %1251 = vmatprep.mubr.f32.mxu0 0.0
        %1252 = vmatmul.mubr.f32.gmra.mrb[0].mxu0 %v1185
        %v1253 = vpop.f32.mrb[0].mxu0
        %v1254 = vadd.f32 %v1183, %v1253
        %v1255 = vpop.f32.mrb[0].mxu0
        %1256 = vdwg.mxu0
        %v1257 = vmax.f32 %v1254, 0.0
        %v1258 = vld [vmem:[%s12] sm:$0xff]
        %v1259 = vld [vmem:[%s12 + $0x8] sm:$0xff]
        %v1260 = vld [vmem:[%s13] sm:$0x1]
        %v1262 = vsel %vm573, %v1257, 0
        %1264 = vmatprep.subr.mxu0 0.0
        %1265 = vmatpush1.msra.mxu0 %v1258
        %1266 = vmatprep.subr.mxu0 0.0
        %1267 = vmatpush1.msra.mxu0 %v1259
        %1268 = vmatprep.subr.mxu0 0.0
        %1269 = vmatpush1.msra.mxu0 0.0
        %1270 = vmatprep.subr.mxu0 0.0
        %1271 = vmatpush1.msra.mxu0 0.0
        %1272 = vmatprep.subr.mxu0 0.0
        %1273 = vmatpush1.msra.mxu0 0.0
        %1274 = vmatprep.subr.mxu0 0.0
        %1275 = vmatpush1.msra.mxu0 0.0
        %1276 = vmatprep.subr.mxu0 0.0
        %1277 = vmatpush1.msra.mxu0 0.0
        %1278 = vmatprep.subr.mxu0 0.0
        %1279 = vmatpush1.msra.mxu0 0.0
        %1280 = vmatprep.subr.mxu0 0.0
        %1281 = vmatpush1.msra.mxu0 0.0
        %1282 = vmatprep.subr.mxu0 0.0
        %1283 = vmatpush1.msra.mxu0 0.0
        %1284 = vmatprep.subr.mxu0 0.0
        %1285 = vmatpush1.msra.mxu0 0.0
        %1286 = vmatprep.subr.mxu0 0.0
        %1287 = vmatpush1.msra.mxu0 0.0
        %1288 = vmatprep.subr.mxu0 0.0
        %1289 = vmatpush1.msra.mxu0 0.0
        %1290 = vmatprep.subr.mxu0 0.0
        %1291 = vmatpush1.msra.mxu0 0.0
        %1292 = vmatprep.subr.mxu0 0.0
        %1293 = vmatpush1.msra.mxu0 0.0
        %1294 = vmatprep.subr.mxu0 0.0
        %1295 = vmatpush1.msra.mxu0 0.0
        %1296 = vmatprep.subr.mxu0 0.0
        %1297 = vmatpush1.msra.mxu0 0.0
        %1298 = vmatprep.subr.mxu0 0.0
        %1299 = vmatpush1.msra.mxu0 0.0
        %1300 = vmatprep.subr.mxu0 0.0
        %1301 = vmatpush1.msra.mxu0 0.0
        %1302 = vmatprep.subr.mxu0 0.0
        %1303 = vmatpush1.msra.mxu0 0.0
        %1304 = vmatprep.subr.mxu0 0.0
        %1305 = vmatpush1.msra.mxu0 0.0
        %1306 = vmatprep.subr.mxu0 0.0
        %1307 = vmatpush1.msra.mxu0 0.0
        %1308 = vmatprep.subr.mxu0 0.0
        %1309 = vmatpush1.msra.mxu0 0.0
        %1310 = vmatprep.subr.mxu0 0.0
        %1311 = vmatpush1.msra.mxu0 0.0
        %1312 = vmatprep.subr.mxu0 0.0
        %1313 = vmatpush1.msra.mxu0 0.0
        %1314 = vmatprep.subr.mxu0 0.0
        %1315 = vmatpush1.msra.mxu0 0.0
        %1316 = vmatprep.subr.mxu0 0.0
        %1317 = vmatpush1.msra.mxu0 0.0
        %1318 = vmatprep.subr.mxu0 0.0
        %1319 = vmatpush1.msra.mxu0 0.0
        %1320 = vmatprep.subr.mxu0 0.0
        %1321 = vmatpush1.msra.mxu0 0.0
        %1322 = vmatprep.subr.mxu0 0.0
        %1323 = vmatpush1.msra.mxu0 0.0
        %1324 = vmatprep.subr.mxu0 0.0
        %1325 = vmatpush1.msra.mxu0 0.0
        %1326 = vmatprep.subr.mxu0 0.0
        %1327 = vmatpush1.msra.mxu0 0.0
        %1328 = vmatprep.mubr.f32.mxu0 0.0
        %1329 = vmatmul.mubr.f32.gmra.mrb[0].mxu0 %v1262
        %v1330 = vpop.f32.mrb[0].mxu0
        %v1331 = vadd.f32 %v1260, %v1330
        %v1332 = vpop.f32.mrb[0].mxu0
        %1333 = vdwg.mxu0
        %v1334 = vmax.f32 %v1331, 0.0
        %v1335 = vld [vmem:[%s14] sm:$0xff]
        %v1336 = vld [vmem:[%s14 + $0x8] sm:$0xff]
        %v1337 = vld [vmem:[%s15] sm:$0x1]
        %v1339 = vsel %vm573, %v1334, 0
        %1341 = vmatprep.subr.mxu0 0.0
        %1342 = vmatpush1.msra.mxu0 %v1335
        %1343 = vmatprep.subr.mxu0 0.0
        %1344 = vmatpush1.msra.mxu0 %v1336
        %1345 = vmatprep.subr.mxu0 0.0
        %1346 = vmatpush1.msra.mxu0 0.0
        %1347 = vmatprep.subr.mxu0 0.0
        %1348 = vmatpush1.msra.mxu0 0.0
        %1349 = vmatprep.subr.mxu0 0.0
        %1350 = vmatpush1.msra.mxu0 0.0
        %1351 = vmatprep.subr.mxu0 0.0
        %1352 = vmatpush1.msra.mxu0 0.0
        %1353 = vmatprep.subr.mxu0 0.0
        %1354 = vmatpush1.msra.mxu0 0.0
        %1355 = vmatprep.subr.mxu0 0.0
        %1356 = vmatpush1.msra.mxu0 0.0
        %1357 = vmatprep.subr.mxu0 0.0
        %1358 = vmatpush1.msra.mxu0 0.0
        %1359 = vmatprep.subr.mxu0 0.0
        %1360 = vmatpush1.msra.mxu0 0.0
        %1361 = vmatprep.subr.mxu0 0.0
        %1362 = vmatpush1.msra.mxu0 0.0
        %1363 = vmatprep.subr.mxu0 0.0
        %1364 = vmatpush1.msra.mxu0 0.0
        %1365 = vmatprep.subr.mxu0 0.0
        %1366 = vmatpush1.msra.mxu0 0.0
        %1367 = vmatprep.subr.mxu0 0.0
        %1368 = vmatpush1.msra.mxu0 0.0
        %1369 = vmatprep.subr.mxu0 0.0
        %1370 = vmatpush1.msra.mxu0 0.0
        %1371 = vmatprep.subr.mxu0 0.0
        %1372 = vmatpush1.msra.mxu0 0.0
        %1373 = vmatprep.subr.mxu0 0.0
        %1374 = vmatpush1.msra.mxu0 0.0
        %1375 = vmatprep.subr.mxu0 0.0
        %1376 = vmatpush1.msra.mxu0 0.0
        %1377 = vmatprep.subr.mxu0 0.0
        %1378 = vmatpush1.msra.mxu0 0.0
        %1379 = vmatprep.subr.mxu0 0.0
        %1380 = vmatpush1.msra.mxu0 0.0
        %1381 = vmatprep.subr.mxu0 0.0
        %1382 = vmatpush1.msra.mxu0 0.0
        %1383 = vmatprep.subr.mxu0 0.0
        %1384 = vmatpush1.msra.mxu0 0.0
        %1385 = vmatprep.subr.mxu0 0.0
        %1386 = vmatpush1.msra.mxu0 0.0
        %1387 = vmatprep.subr.mxu0 0.0
        %1388 = vmatpush1.msra.mxu0 0.0
        %1389 = vmatprep.subr.mxu0 0.0
        %1390 = vmatpush1.msra.mxu0 0.0
        %1391 = vmatprep.subr.mxu0 0.0
        %1392 = vmatpush1.msra.mxu0 0.0
        %1393 = vmatprep.subr.mxu0 0.0
        %1394 = vmatpush1.msra.mxu0 0.0
        %1395 = vmatprep.subr.mxu0 0.0
        %1396 = vmatpush1.msra.mxu0 0.0
        %1397 = vmatprep.subr.mxu0 0.0
        %1398 = vmatpush1.msra.mxu0 0.0
        %1399 = vmatprep.subr.mxu0 0.0
        %1400 = vmatpush1.msra.mxu0 0.0
        %1401 = vmatprep.subr.mxu0 0.0
        %1402 = vmatpush1.msra.mxu0 0.0
        %1403 = vmatprep.subr.mxu0 0.0
        %1404 = vmatpush1.msra.mxu0 0.0
        %1405 = vmatprep.mubr.f32.mxu0 0.0
        %1406 = vmatmul.mubr.f32.gmra.mrb[0].mxu0 %v1339
        %v1407 = vpop.f32.mrb[0].mxu0
        %v1408 = vadd.f32 %v1337, %v1407
        %v1409 = vpop.f32.mrb[0].mxu0
        %1410 = vdwg.mxu0
        %1411 = vst [vmem:[%s541] sm:$0x1] %v1408
        %s1412 = sand.u32 %s389, 1
        %s1413 = scalar_lea.sflag [#allocation3], %s1412
        %s1414 = sand.u32 %s389, 1
        %s1415 = scalar_lea.vmem [#allocation2], %s1414
        // Predicated region
        $region85: #{_lambda_.1} parent=83 // pred_check
          %p1416 = pneg %p399
        $region86: #{_lambda_.1} parent=83 // pred_check_branch
          %1418 = sbr.rel (%p1416) target = $region88
        $region87: #{_lambda_.1} parent=83 // pred_region
          %s1420 = ssub.s32 16, 16
          %1421 = vsyncadd %s1413, %s1420
          %s1422 = smul.addr %s30, 16
          %s1423 = scalar_lea.hbm %s16, %s1422
          %s1425 = sshll.u32 %s1415, 4
          %s1426 = int_to_ptr.vmem [resolvable:$true] %s1425
          %1428 = dma.vmem_to_hbm [thread:$0]  %s1426, 16, %s1423, %s1413
        $region88: #{_lambda_.1} parent=83 // pred_fallthru
          _
      $region84: #{_lambda_.1} parent=5 // pred_fallthru
        _
      %p1429 = scmp.le.s32.totalorder 2, %s25
      // Predicated region
      $region89: #{_lambda_.1} parent=5 // pred_check
        %p1430 = pneg %p1429
      $region90: #{_lambda_.1} parent=5 // pred_check_branch
        %1432 = sbr.rel (%p1430) target = $region92
      $region91: #{_lambda_.1} parent=5 // pred_region
        %s1433 = ssub.s32 %s25, 2
        // Predicated region
        $region93: #{_lambda_.1} parent=91 // pred_check
          %p1434 = pneg %p405
        $region94: #{_lambda_.1} parent=91 // pred_check_branch
          %1436 = sbr.rel (%p1434) target = $region96
        $region95: #{_lambda_.1} parent=91 // pred_region
          %s1437 = sand.u32 %s390, 1
          %s1438 = scalar_lea.sflag [#allocation3], %s1437
          %s1439 = sand.u32 %s390, 1
          %s1440 = scalar_lea.vmem [#allocation2], %s1439
          %1441 = dma.done %s1438, 16
        $region96: #{_lambda_.1} parent=91 // pred_fallthru
          _
      $region92: #{_lambda_.1} parent=5 // pred_fallthru
        _
    $region6: #{_lambda_.1} parent=1 // loop_footer
      %s29 = sadd.s32 1, %s25
    $region7: #{_lambda_.1} parent=1 // loop_footer_branch
      %24 = sbr.rel target = $region3
    $region8: #{_lambda_.1} parent=1 // loop_exit
      _
    %1442 = vsyncpa [#allocation3], 1
    %s1443 = scalar_lea.sflag [#allocation3], 1
    %1444 = vsyncpa %s1443, 1

</llo_original>
